<compile_context>
chip_gen: v7x
topology: tpu7x:2x2x1
jax: 0.10.0
libtpu: 0.0.40
codegen_flags: <defaults>
</compile_context>

<pallas_src>
import jax
import jax.numpy as jnp
from jax.experimental import pallas as pl
from jax.experimental.pallas import tpu as pltpu

IN_DIM, HID_DIM, OUT_DIM = 200, 300, 30
PAD_IN, PAD_HID, PAD_OUT = 256, 384, 128  # lane-multiple (128) padded dims


def _round_up(n, m):
    return ((n + m - 1) // m) * m


def _net200_kernel(x_ref,
                   w1_ref, b1_ref,
                   w2_ref, b2_ref,
                   w3_ref, b3_ref,
                   w4_ref, b4_ref,
                   o_ref):
    """Whole MLP hot path: 4 MXU matmuls + VPU bias/ReLU, f32 accumulation."""
    cdt = w1_ref.dtype  # operand dtype for the MXU (f32 or bf16)

    x = x_ref[...].astype(cdt)

    h = jnp.dot(x, w1_ref[...], preferred_element_type=jnp.float32) + b1_ref[...]
    h = jnp.maximum(h, 0.0)

    h = jnp.dot(h.astype(cdt), w2_ref[...],
                preferred_element_type=jnp.float32) + b2_ref[...]
    h = jnp.maximum(h, 0.0)

    h = jnp.dot(h.astype(cdt), w3_ref[...],
                preferred_element_type=jnp.float32) + b3_ref[...]
    h = jnp.maximum(h, 0.0)

    out = jnp.dot(h.astype(cdt), w4_ref[...],
                  preferred_element_type=jnp.float32) + b4_ref[...]
    o_ref[...] = out.astype(o_ref.dtype)


def prepare_net200_params(params, compute_dtype=jnp.float32):
    """One-time prep: transpose to (in, out), zero-pad to lane multiples.

    params: PyTorch-layout dict, w_i (out_f, in_f), b_i (out_f,).
    compute_dtype: jnp.float32 (exact) or jnp.bfloat16 (faster MXU operands;
                   accumulation stays f32 inside the kernel).
    """
    def pad_w(w, rows, cols):
        wt = jnp.asarray(w, jnp.float32).T  # (in_f, out_f)
        wt = jnp.pad(wt, ((0, rows - wt.shape[0]), (0, cols - wt.shape[1])))
        return wt.astype(compute_dtype)

    def pad_b(b, cols):
        b = jnp.asarray(b, jnp.float32)[None, :]
        return jnp.pad(b, ((0, 0), (0, cols - b.shape[1])))  # bias stays f32

    return {
        "w1": pad_w(params["w1"], PAD_IN, PAD_HID),  "b1": pad_b(params["b1"], PAD_HID),
        "w2": pad_w(params["w2"], PAD_HID, PAD_HID), "b2": pad_b(params["b2"], PAD_HID),
        "w3": pad_w(params["w3"], PAD_HID, PAD_HID), "b3": pad_b(params["b3"], PAD_HID),
        "w4": pad_w(params["w4"], PAD_HID, PAD_OUT), "b4": pad_b(params["b4"], PAD_OUT),
    }


def net200_forward(x, prepared, *, batch_tile=None):
    """Run the Net200 forward pass with a single Pallas TPU kernel.

    x:        (B, 200) float32
    prepared: output of prepare_net200_params (padded, transposed params)
    """
    B, in_dim = x.shape
    assert in_dim == IN_DIM, in_dim

    # Bounded batch tile: multiple of 8, capped so per-step VMEM is small and
    # large batches give a multi-step parallel grid (pipelining / 2 TCs on v7x).
    if batch_tile is None:
        batch_tile = min(_round_up(B, 8), 1024)
    batch_tile = _round_up(batch_tile, 8)
    B_pad = _round_up(B, batch_tile)

    # Per-call input prep: zero-pad batch and feature dims (zeros are inert
    # since the matching weight rows are zero).
    x_pad = jnp.pad(x.astype(jnp.float32),
                    ((0, B_pad - B), (0, PAD_IN - IN_DIM)))

    grid = (B_pad // batch_tile,)

    def full_block(arr):
        # Full-array resident block for weights/biases (constant index_map).
        nd = arr.ndim
        return pl.BlockSpec(arr.shape, lambda i, _nd=nd: (0,) * _nd)

    w1, b1 = prepared["w1"], prepared["b1"]
    w2, b2 = prepared["w2"], prepared["b2"]
    w3, b3 = prepared["w3"], prepared["b3"]
    w4, b4 = prepared["w4"], prepared["b4"]

    in_specs = [
        pl.BlockSpec((batch_tile, PAD_IN), lambda i: (i, 0)),  # x tiled over batch
        full_block(w1), full_block(b1),
        full_block(w2), full_block(b2),
        full_block(w3), full_block(b3),
        full_block(w4), full_block(b4),
    ]
    out_specs = pl.BlockSpec((batch_tile, PAD_OUT), lambda i: (i, 0))

    # Advisory cost hint so XLA schedules surrounding ops sensibly.
    flops = 2 * B_pad * (PAD_IN * PAD_HID + 2 * PAD_HID * PAD_HID
                         + PAD_HID * PAD_OUT)
    param_bytes = sum(int(a.size) * a.dtype.itemsize
                      for a in (w1, b1, w2, b2, w3, b3, w4, b4))
    bytes_accessed = (x_pad.size * 4) + param_bytes + (B_pad * PAD_OUT * 4)
    cost = pl.CostEstimate(flops=flops, transcendentals=0,
                           bytes_accessed=bytes_accessed)

    fn = pl.pallas_call(
        _net200_kernel,
        out_shape=jax.ShapeDtypeStruct((B_pad, PAD_OUT), jnp.float32),
        grid_spec=pltpu.PrefetchScalarGridSpec(
            num_scalar_prefetch=0,
            grid=grid,
            in_specs=in_specs,
            out_specs=out_specs,
        ),
        compiler_params=pltpu.CompilerParams(
            dimension_semantics=("parallel",),
        ),
        cost_estimate=cost,
    )
    out_pad = fn(x_pad, w1, b1, w2, b2, w3, b3, w4, b4)

    # Slice back to the true (B, 30) output.
    return out_pad[:B, :OUT_DIM]


def init_net200_params(key):
    """Deterministic init mimicking nn.Linear default (uniform +-1/sqrt(fan_in))."""
    dims = [(300, 200), (300, 300), (300, 300), (30, 300)]
    params = {}
    for idx, (out_f, in_f) in enumerate(dims, start=1):
        key, kw, kb = jax.random.split(key, 3)
        bound = 1.0 / jnp.sqrt(jnp.float32(in_f))
        params[f"w{idx}"] = jax.random.uniform(
            kw, (out_f, in_f), jnp.float32, minval=-bound, maxval=bound)
        params[f"b{idx}"] = jax.random.uniform(
            kb, (out_f,), jnp.float32, minval=-bound, maxval=bound)
    return params


def net200_reference(x, params):
    """Pure-JAX reference identical to the PyTorch forward."""
    h = jnp.maximum(x @ params["w1"].T + params["b1"], 0.0)
    h = jnp.maximum(h @ params["w2"].T + params["b2"], 0.0)
    h = jnp.maximum(h @ params["w3"].T + params["b3"], 0.0)
    return h @ params["w4"].T + params["b4"]


if __name__ == "__main__":
    key = jax.random.PRNGKey(0)
    key, kx = jax.random.split(key)

    B = 8  # small batch for the correctness check
    x = jax.random.normal(kx, (B, IN_DIM), dtype=jnp.float32)
    params = init_net200_params(key)

    # One-time parameter prep (f32 operands => exact vs reference).
    prepared = prepare_net200_params(params, compute_dtype=jnp.float32)

    out = net200_forward(x, prepared)
    out = jax.block_until_ready(out)

    ref = net200_reference(x, params)
    assert out.shape == (B, OUT_DIM), out.shape
    assert jnp.allclose(out, ref, atol=1e-4, rtol=1e-4), "mismatch vs reference"

    # Optional bf16-operand / f32-accumulate fast path (looser tolerance).
    prepared_bf16 = prepare_net200_params(params, compute_dtype=jnp.bfloat16)
    out_bf16 = jax.block_until_ready(net200_forward(x, prepared_bf16))
    assert out_bf16.shape == (B, OUT_DIM)
    assert jnp.allclose(out_bf16, ref, atol=5e-2, rtol=5e-2), "bf16 path far off"

    print("KERNEL_OK")
</pallas_src>

<mosaic_0001>
module attributes {stable_mosaic.version = 11 : i64} {
  func.func @_net200_kernel(%arg0: i32, %arg1: memref<8x256xf32, #tpu.memory_space<vmem>>, %arg2: memref<256x384xf32, #tpu.memory_space<vmem>>, %arg3: memref<1x384xf32, #tpu.memory_space<vmem>>, %arg4: memref<384x384xf32, #tpu.memory_space<vmem>>, %arg5: memref<1x384xf32, #tpu.memory_space<vmem>>, %arg6: memref<384x384xf32, #tpu.memory_space<vmem>>, %arg7: memref<1x384xf32, #tpu.memory_space<vmem>>, %arg8: memref<384x128xf32, #tpu.memory_space<vmem>>, %arg9: memref<1x128xf32, #tpu.memory_space<vmem>>, %arg10: memref<8x128xf32, #tpu.memory_space<vmem>>) attributes {dimension_semantics = [#tpu.dimension_semantics<parallel>], iteration_bounds = array<i64: 1>, scalar_prefetch = 0 : i64, scratch_operands = 0 : i64, tpu.core_type = #tpu.core_type<tc>, window_params = [{transform_indices = @transform_0, window_bounds = array<i64: 8, 256>}, {pipeline_mode = #tpu.pipeline_mode<synchronous>, transform_indices = @transform_1, window_bounds = array<i64: 256, 384>}, {pipeline_mode = #tpu.pipeline_mode<synchronous>, transform_indices = @transform_2, window_bounds = array<i64: 1, 384>}, {pipeline_mode = #tpu.pipeline_mode<synchronous>, transform_indices = @transform_3, window_bounds = array<i64: 384, 384>}, {pipeline_mode = #tpu.pipeline_mode<synchronous>, transform_indices = @transform_4, window_bounds = array<i64: 1, 384>}, {pipeline_mode = #tpu.pipeline_mode<synchronous>, transform_indices = @transform_5, window_bounds = array<i64: 384, 384>}, {pipeline_mode = #tpu.pipeline_mode<synchronous>, transform_indices = @transform_6, window_bounds = array<i64: 1, 384>}, {pipeline_mode = #tpu.pipeline_mode<synchronous>, transform_indices = @transform_7, window_bounds = array<i64: 384, 128>}, {pipeline_mode = #tpu.pipeline_mode<synchronous>, transform_indices = @transform_8, window_bounds = array<i64: 1, 128>}, {transform_indices = @transform_9, window_bounds = array<i64: 8, 128>}]} {
    %c0 = arith.constant 0 : index
    %c0_0 = arith.constant 0 : index
    %0 = vector.load %arg1[%c0, %c0_0] : memref<8x256xf32, #tpu.memory_space<vmem>>, vector<8x256xf32>
    %c0_1 = arith.constant 0 : index
    %c0_2 = arith.constant 0 : index
    %1 = vector.load %arg2[%c0_1, %c0_2] : memref<256x384xf32, #tpu.memory_space<vmem>>, vector<256x384xf32>
    %cst = arith.constant dense<0.000000e+00> : vector<8x384xf32>
    %2 = tpu.matmul %0, %1, %cst {dimension_numbers = #tpu.dot_dimension_numbers<[1], [0], [0], [1], [0, 0, 1, 1], [], []>} : vector<8x256xf32>, vector<256x384xf32>, vector<8x384xf32> -> vector<8x384xf32>
    %c0_3 = arith.constant 0 : index
    %c0_4 = arith.constant 0 : index
    %3 = vector.load %arg3[%c0_3, %c0_4] : memref<1x384xf32, #tpu.memory_space<vmem>>, vector<1x384xf32>
    %4 = vector.broadcast %3 : vector<1x384xf32> to vector<8x384xf32>
    %5 = arith.addf %2, %4 : vector<8x384xf32>
    %cst_5 = arith.constant 0.000000e+00 : f32
    %6 = vector.broadcast %cst_5 : f32 to vector<8x384xf32>
    %7 = arith.maximumf %5, %6 : vector<8x384xf32>
    %c0_6 = arith.constant 0 : index
    %c0_7 = arith.constant 0 : index
    %8 = vector.load %arg4[%c0_6, %c0_7] : memref<384x384xf32, #tpu.memory_space<vmem>>, vector<384x384xf32>
    %cst_8 = arith.constant dense<0.000000e+00> : vector<8x384xf32>
    %9 = tpu.matmul %7, %8, %cst_8 {dimension_numbers = #tpu.dot_dimension_numbers<[1], [0], [0], [1], [0, 0, 1, 1], [], []>} : vector<8x384xf32>, vector<384x384xf32>, vector<8x384xf32> -> vector<8x384xf32>
    %c0_9 = arith.constant 0 : index
    %c0_10 = arith.constant 0 : index
    %10 = vector.load %arg5[%c0_9, %c0_10] : memref<1x384xf32, #tpu.memory_space<vmem>>, vector<1x384xf32>
    %11 = vector.broadcast %10 : vector<1x384xf32> to vector<8x384xf32>
    %12 = arith.addf %9, %11 : vector<8x384xf32>
    %cst_11 = arith.constant 0.000000e+00 : f32
    %13 = vector.broadcast %cst_11 : f32 to vector<8x384xf32>
    %14 = arith.maximumf %12, %13 : vector<8x384xf32>
    %c0_12 = arith.constant 0 : index
    %c0_13 = arith.constant 0 : index
    %15 = vector.load %arg6[%c0_12, %c0_13] : memref<384x384xf32, #tpu.memory_space<vmem>>, vector<384x384xf32>
    %cst_14 = arith.constant dense<0.000000e+00> : vector<8x384xf32>
    %16 = tpu.matmul %14, %15, %cst_14 {dimension_numbers = #tpu.dot_dimension_numbers<[1], [0], [0], [1], [0, 0, 1, 1], [], []>} : vector<8x384xf32>, vector<384x384xf32>, vector<8x384xf32> -> vector<8x384xf32>
    %c0_15 = arith.constant 0 : index
    %c0_16 = arith.constant 0 : index
    %17 = vector.load %arg7[%c0_15, %c0_16] : memref<1x384xf32, #tpu.memory_space<vmem>>, vector<1x384xf32>
    %18 = vector.broadcast %17 : vector<1x384xf32> to vector<8x384xf32>
    %19 = arith.addf %16, %18 : vector<8x384xf32>
    %cst_17 = arith.constant 0.000000e+00 : f32
    %20 = vector.broadcast %cst_17 : f32 to vector<8x384xf32>
    %21 = arith.maximumf %19, %20 : vector<8x384xf32>
    %c0_18 = arith.constant 0 : index
    %c0_19 = arith.constant 0 : index
    %22 = vector.load %arg8[%c0_18, %c0_19] : memref<384x128xf32, #tpu.memory_space<vmem>>, vector<384x128xf32>
    %cst_20 = arith.constant dense<0.000000e+00> : vector<8x128xf32>
    %23 = tpu.matmul %21, %22, %cst_20 {dimension_numbers = #tpu.dot_dimension_numbers<[1], [0], [0], [1], [0, 0, 1, 1], [], []>} : vector<8x384xf32>, vector<384x128xf32>, vector<8x128xf32> -> vector<8x128xf32>
    %c0_21 = arith.constant 0 : index
    %c0_22 = arith.constant 0 : index
    %24 = vector.load %arg9[%c0_21, %c0_22] : memref<1x128xf32, #tpu.memory_space<vmem>>, vector<1x128xf32>
    %25 = vector.broadcast %24 : vector<1x128xf32> to vector<8x128xf32>
    %26 = arith.addf %23, %25 : vector<8x128xf32>
    %c0_23 = arith.constant 0 : index
    %c0_24 = arith.constant 0 : index
    %27 = vector.load %arg10[%c0_23, %c0_24] : memref<8x128xf32, #tpu.memory_space<vmem>>, vector<8x128xf32>
    tpu.vector_store %arg10[%c0_23, %c0_24], %26 {strides = array<i32>} : memref<8x128xf32, #tpu.memory_space<vmem>>, vector<8x128xf32>,
    return
  }
  func.func @transform_0(%arg0: i32) -> (i32, i32) {
    %c0_i32 = arith.constant 0 : i32
    %c0_i32_0 = arith.constant 0 : i32
    return %arg0, %c0_i32 : i32, i32
  }
  func.func @transform_1(%arg0: i32) -> (i32, i32) {
    %c0_i32 = arith.constant 0 : i32
    %c0_i32_0 = arith.constant 0 : i32
    %c0_i32_1 = arith.constant 0 : i32
    return %c0_i32, %c0_i32_0 : i32, i32
  }
  func.func @transform_2(%arg0: i32) -> (i32, i32) {
    %c0_i32 = arith.constant 0 : i32
    %c0_i32_0 = arith.constant 0 : i32
    %c0_i32_1 = arith.constant 0 : i32
    return %c0_i32, %c0_i32_0 : i32, i32
  }
  func.func @transform_3(%arg0: i32) -> (i32, i32) {
    %c0_i32 = arith.constant 0 : i32
    %c0_i32_0 = arith.constant 0 : i32
    %c0_i32_1 = arith.constant 0 : i32
    return %c0_i32, %c0_i32_0 : i32, i32
  }
  func.func @transform_4(%arg0: i32) -> (i32, i32) {
    %c0_i32 = arith.constant 0 : i32
    %c0_i32_0 = arith.constant 0 : i32
    %c0_i32_1 = arith.constant 0 : i32
    return %c0_i32, %c0_i32_0 : i32, i32
  }
  func.func @transform_5(%arg0: i32) -> (i32, i32) {
    %c0_i32 = arith.constant 0 : i32
    %c0_i32_0 = arith.constant 0 : i32
    %c0_i32_1 = arith.constant 0 : i32
    return %c0_i32, %c0_i32_0 : i32, i32
  }
  func.func @transform_6(%arg0: i32) -> (i32, i32) {
    %c0_i32 = arith.constant 0 : i32
    %c0_i32_0 = arith.constant 0 : i32
    %c0_i32_1 = arith.constant 0 : i32
    return %c0_i32, %c0_i32_0 : i32, i32
  }
  func.func @transform_7(%arg0: i32) -> (i32, i32) {
    %c0_i32 = arith.constant 0 : i32
    %c0_i32_0 = arith.constant 0 : i32
    %c0_i32_1 = arith.constant 0 : i32
    return %c0_i32, %c0_i32_0 : i32, i32
  }
  func.func @transform_8(%arg0: i32) -> (i32, i32) {
    %c0_i32 = arith.constant 0 : i32
    %c0_i32_0 = arith.constant 0 : i32
    %c0_i32_1 = arith.constant 0 : i32
    return %c0_i32, %c0_i32_0 : i32, i32
  }
  func.func @transform_9(%arg0: i32) -> (i32, i32) {
    %c0_i32 = arith.constant 0 : i32
    %c0_i32_0 = arith.constant 0 : i32
    return %arg0, %c0_i32 : i32, i32
  }
}

</mosaic_0001>

<llo_original>
// kernel: tpu_custom_call.1
$region0: #{tpu_custom_call.1}
  #allocation0 [shape = 'u32[]', space=smem, size = 0x4, offset = 0x4, fixed_abs, tag = 'smem constant byte address 0x4 - core index']
  #allocation1 [shape = 'u32[144,128]{1,0:T(1,128)}', space=vmem, size = 0x12000, scoped, tag = 'internal scratch']
  %s0 = inlined_call_operand.hbm [shape: f32[8,256], index: 0, kind: input, shape index: {}]
  %s1 = inlined_call_operand.hbm [shape: f32[256,384], index: 1, kind: input, shape index: {}]
  %s2 = inlined_call_operand.vmem [shape: f32[1,384], index: 2, kind: input, shape index: {}]
  %s3 = inlined_call_operand.hbm [shape: f32[384,384], index: 3, kind: input, shape index: {}]
  %s4 = inlined_call_operand.vmem [shape: f32[1,384], index: 4, kind: input, shape index: {}]
  %s5 = inlined_call_operand.hbm [shape: f32[384,384], index: 5, kind: input, shape index: {}]
  %s6 = inlined_call_operand.vmem [shape: f32[1,384], index: 6, kind: input, shape index: {}]
  %s7 = inlined_call_operand.hbm [shape: f32[384,128], index: 7, kind: input, shape index: {}]
  %s8 = inlined_call_operand.vmem [shape: f32[1,128], index: 8, kind: input, shape index: {}]
  %s9 = inlined_call_operand.hbm [shape: f32[8,128], index: 9, kind: output, shape index: {}]
  %s10 = sld [smem:[#allocation0]]
  $region66: #{tpu_custom_call.1} parent=0
    _
  %s12 = ssub.s32 1, %s10
  %s13 = scalar_select 0, %s12, %s10
  $region1: #{tpu_custom_call.1} parent=0
    #allocation2 [shape = 'u8[8192]{0}', space=vmem, size = 0x2000, scoped, tag = 'input window, operand 0, single buffered']
    #allocation3 [shape = 's32[1]{0}', space=sflag, size = 0x4, scoped, tag = 'scoped memory for tpu_custom_call.1']
    #allocation4 [shape = 's32[1]{0}', space=sflag, size = 0x4, scoped, tag = 'scoped memory for tpu_custom_call.1']
    #allocation5 [shape = 'u8[393216]{0}', space=vmem, size = 0x60000, scoped, tag = 'input window, operand 1, single buffered']
    #allocation6 [shape = 's32[1]{0}', space=sflag, size = 0x4, scoped, tag = 'scoped memory for tpu_custom_call.1']
    #allocation7 [shape = 'u8[589824]{0}', space=vmem, size = 0x90000, scoped, tag = 'input window, operand 3, single buffered']
    #allocation8 [shape = 'u8[589824]{0}', space=vmem, size = 0x90000, scoped, tag = 'input window, operand 5, single buffered']
    #allocation9 [shape = 's32[1]{0}', space=sflag, size = 0x4, scoped, tag = 'scoped memory for tpu_custom_call.1']
    #allocation10 [shape = 'u8[196608]{0}', space=vmem, size = 0x30000, scoped, tag = 'input window, operand 7, single buffered']
    #allocation11 [shape = 'u8[4096]{0}', space=vmem, size = 0x1000, scoped, tag = 'output window, operand 0, single buffered']
    %14 = vsyncpa [#allocation3], 0
    %15 = vsyncpa [#allocation6], 0
    %16 = vsyncpa [#allocation9], 0
    %17 = vsyncpa [#allocation4], 0
    // Predicated region
    $region2: #{tpu_custom_call.1} parent=1 // pred_check
      _
    $region3: #{tpu_custom_call.1} parent=1 // pred_check_branch
      %19 = sbr.rel (0) target = $region5
    $region4: #{tpu_custom_call.1} parent=1 // pred_region
      %s21 = ssub.s32 256, 256
      %22 = vsyncadd [#allocation3], %s21
      %s24 = sshll.u32 [#allocation2], 4
      %s25 = int_to_ptr.vmem [resolvable:$true] %s24
      %27 = dma.hbm_to_vmem [thread:$0]  %s0, 256, %s25, [#allocation3]
    $region5: #{tpu_custom_call.1} parent=1 // pred_fallthru
      _
    // Predicated region
    $region6: #{tpu_custom_call.1} parent=1 // pred_check
      _
    $region7: #{tpu_custom_call.1} parent=1 // pred_check_branch
      %29 = sbr.rel (0) target = $region9
    $region8: #{tpu_custom_call.1} parent=1 // pred_region
      %s31 = ssub.s32 12288, 12288
      %32 = vsyncadd [#allocation6], %s31
      %s33 = sshll.u32 [#allocation5], 4
      %s34 = int_to_ptr.vmem [resolvable:$true] %s33
      %39 = dma.hbm_to_vmem [thread:$0]  %s1, 12288, %s34, [#allocation6], 384, 384, 24
    $region9: #{tpu_custom_call.1} parent=1 // pred_fallthru
      _
    // Predicated region
    $region10: #{tpu_custom_call.1} parent=1 // pred_check
      _
    $region11: #{tpu_custom_call.1} parent=1 // pred_check_branch
      %41 = sbr.rel (0) target = $region13
    $region12: #{tpu_custom_call.1} parent=1 // pred_region
      _
    $region13: #{tpu_custom_call.1} parent=1 // pred_fallthru
      _
    // Predicated region
    $region14: #{tpu_custom_call.1} parent=1 // pred_check
      _
    $region15: #{tpu_custom_call.1} parent=1 // pred_check_branch
      %43 = sbr.rel (0) target = $region17
    $region16: #{tpu_custom_call.1} parent=1 // pred_region
      %s45 = ssub.s32 18432, 18432
      %46 = vsyncadd [#allocation6], %s45
      %s47 = sshll.u32 [#allocation7], 4
      %s48 = int_to_ptr.vmem [resolvable:$true] %s47
      %53 = dma.hbm_to_vmem [thread:$0]  %s3, 18432, %s48, [#allocation6], 384, 384, 24
    $region17: #{tpu_custom_call.1} parent=1 // pred_fallthru
      _
    // Predicated region
    $region18: #{tpu_custom_call.1} parent=1 // pred_check
      _
    $region19: #{tpu_custom_call.1} parent=1 // pred_check_branch
      %55 = sbr.rel (0) target = $region21
    $region20: #{tpu_custom_call.1} parent=1 // pred_region
      _
    $region21: #{tpu_custom_call.1} parent=1 // pred_fallthru
      _
    // Predicated region
    $region22: #{tpu_custom_call.1} parent=1 // pred_check
      _
    $region23: #{tpu_custom_call.1} parent=1 // pred_check_branch
      %57 = sbr.rel (0) target = $region25
    $region24: #{tpu_custom_call.1} parent=1 // pred_region
      %s59 = ssub.s32 18432, 18432
      %60 = vsyncadd [#allocation9], %s59
      %s61 = sshll.u32 [#allocation8], 4
      %s62 = int_to_ptr.vmem [resolvable:$true] %s61
      %67 = dma.hbm_to_vmem [thread:$0]  %s5, 18432, %s62, [#allocation9], 384, 384, 24
    $region25: #{tpu_custom_call.1} parent=1 // pred_fallthru
      _
    // Predicated region
    $region26: #{tpu_custom_call.1} parent=1 // pred_check
      _
    $region27: #{tpu_custom_call.1} parent=1 // pred_check_branch
      %69 = sbr.rel (0) target = $region29
    $region28: #{tpu_custom_call.1} parent=1 // pred_region
      _
    $region29: #{tpu_custom_call.1} parent=1 // pred_fallthru
      _
    // Predicated region
    $region30: #{tpu_custom_call.1} parent=1 // pred_check
      _
    $region31: #{tpu_custom_call.1} parent=1 // pred_check_branch
      %71 = sbr.rel (0) target = $region33
    $region32: #{tpu_custom_call.1} parent=1 // pred_region
      %s73 = ssub.s32 6144, 6144
      %74 = vsyncadd [#allocation9], %s73
      %s75 = sshll.u32 [#allocation10], 4
      %s76 = int_to_ptr.vmem [resolvable:$true] %s75
      %81 = dma.hbm_to_vmem [thread:$0]  %s7, 6144, %s76, [#allocation9], 128, 128, 8
    $region33: #{tpu_custom_call.1} parent=1 // pred_fallthru
      _
    // Predicated region
    $region34: #{tpu_custom_call.1} parent=1 // pred_check
      _
    $region35: #{tpu_custom_call.1} parent=1 // pred_check_branch
      %83 = sbr.rel (0) target = $region37
    $region36: #{tpu_custom_call.1} parent=1 // pred_region
      _
    $region37: #{tpu_custom_call.1} parent=1 // pred_fallthru
      _
    // Predicated region
    $region38: #{tpu_custom_call.1} parent=1 // pred_check
      _
    $region39: #{tpu_custom_call.1} parent=1 // pred_check_branch
      %85 = sbr.rel (0) target = $region41
    $region40: #{tpu_custom_call.1} parent=1 // pred_region
      %86 = dma.done [#allocation3], 256
    $region41: #{tpu_custom_call.1} parent=1 // pred_fallthru
      _
    // Predicated region
    $region42: #{tpu_custom_call.1} parent=1 // pred_check
      _
    $region43: #{tpu_custom_call.1} parent=1 // pred_check_branch
      %88 = sbr.rel (0) target = $region45
    $region44: #{tpu_custom_call.1} parent=1 // pred_region
      %89 = dma.done [#allocation6], 12288
    $region45: #{tpu_custom_call.1} parent=1 // pred_fallthru
      _
    // Predicated region
    $region46: #{tpu_custom_call.1} parent=1 // pred_check
      _
    $region47: #{tpu_custom_call.1} parent=1 // pred_check_branch
      %91 = sbr.rel (0) target = $region49
    $region48: #{tpu_custom_call.1} parent=1 // pred_region
      %92 = dma.done [#allocation6], 18432
    $region49: #{tpu_custom_call.1} parent=1 // pred_fallthru
      _
    // Predicated region
    $region50: #{tpu_custom_call.1} parent=1 // pred_check
      _
    $region51: #{tpu_custom_call.1} parent=1 // pred_check_branch
      %94 = sbr.rel (0) target = $region53
    $region52: #{tpu_custom_call.1} parent=1 // pred_region
      %95 = dma.done [#allocation9], 18432
    $region53: #{tpu_custom_call.1} parent=1 // pred_fallthru
      _
    // Predicated region
    $region54: #{tpu_custom_call.1} parent=1 // pred_check
      _
    $region55: #{tpu_custom_call.1} parent=1 // pred_check_branch
      %97 = sbr.rel (0) target = $region57
    $region56: #{tpu_custom_call.1} parent=1 // pred_region
      %98 = dma.done [#allocation9], 6144
    $region57: #{tpu_custom_call.1} parent=1 // pred_fallthru
      _
    %v99 = vld [vmem:[#allocation2] sm:$0xff]
    %v100 = vld [vmem:[#allocation2 + $0x8] sm:$0xff]
    %v101 = vld [vmem:[#allocation5] sm:$0xff]
    %v102 = vld [vmem:[#allocation5 + $0x8] sm:$0xff]
    %v103 = vld [vmem:[#allocation5 + $0x10] sm:$0xff]
    %v104 = vld [vmem:[#allocation5 + $0x18] sm:$0xff]
    %v105 = vld [vmem:[#allocation5 + $0x20] sm:$0xff]
    %v106 = vld [vmem:[#allocation5 + $0x28] sm:$0xff]
    %v107 = vld [vmem:[#allocation5 + $0x30] sm:$0xff]
    %v108 = vld [vmem:[#allocation5 + $0x38] sm:$0xff]
    %v109 = vld [vmem:[#allocation5 + $0x40] sm:$0xff]
    %v110 = vld [vmem:[#allocation5 + $0x48] sm:$0xff]
    %v111 = vld [vmem:[#allocation5 + $0x50] sm:$0xff]
    %v112 = vld [vmem:[#allocation5 + $0x58] sm:$0xff]
    %v113 = vld [vmem:[#allocation5 + $0x60] sm:$0xff]
    %v114 = vld [vmem:[#allocation5 + $0x68] sm:$0xff]
    %v115 = vld [vmem:[#allocation5 + $0x70] sm:$0xff]
    %v116 = vld [vmem:[#allocation5 + $0x78] sm:$0xff]
    %v117 = vld [vmem:[#allocation5 + $0x80] sm:$0xff]
    %v118 = vld [vmem:[#allocation5 + $0x88] sm:$0xff]
    %v119 = vld [vmem:[#allocation5 + $0x90] sm:$0xff]
    %v120 = vld [vmem:[#allocation5 + $0x98] sm:$0xff]
    %v121 = vld [vmem:[#allocation5 + $0xa0] sm:$0xff]
    %v122 = vld [vmem:[#allocation5 + $0xa8] sm:$0xff]
    %v123 = vld [vmem:[#allocation5 + $0xb0] sm:$0xff]
    %v124 = vld [vmem:[#allocation5 + $0xb8] sm:$0xff]
    %v125 = vld [vmem:[#allocation5 + $0xc0] sm:$0xff]
    %v126 = vld [vmem:[#allocation5 + $0xc8] sm:$0xff]
    %v127 = vld [vmem:[#allocation5 + $0xd0] sm:$0xff]
    %v128 = vld [vmem:[#allocation5 + $0xd8] sm:$0xff]
    %v129 = vld [vmem:[#allocation5 + $0xe0] sm:$0xff]
    %v130 = vld [vmem:[#allocation5 + $0xe8] sm:$0xff]
    %v131 = vld [vmem:[#allocation5 + $0xf0] sm:$0xff]
    %v132 = vld [vmem:[#allocation5 + $0xf8] sm:$0xff]
    %v133 = vld [vmem:[#allocation5 + $0x100] sm:$0xff]
    %v134 = vld [vmem:[#allocation5 + $0x108] sm:$0xff]
    %v135 = vld [vmem:[#allocation5 + $0x110] sm:$0xff]
    %v136 = vld [vmem:[#allocation5 + $0x118] sm:$0xff]
    %v137 = vld [vmem:[#allocation5 + $0x120] sm:$0xff]
    %v138 = vld [vmem:[#allocation5 + $0x128] sm:$0xff]
    %v139 = vld [vmem:[#allocation5 + $0x130] sm:$0xff]
    %v140 = vld [vmem:[#allocation5 + $0x138] sm:$0xff]
    %v141 = vld [vmem:[#allocation5 + $0x140] sm:$0xff]
    %v142 = vld [vmem:[#allocation5 + $0x148] sm:$0xff]
    %v143 = vld [vmem:[#allocation5 + $0x150] sm:$0xff]
    %v144 = vld [vmem:[#allocation5 + $0x158] sm:$0xff]
    %v145 = vld [vmem:[#allocation5 + $0x160] sm:$0xff]
    %v146 = vld [vmem:[#allocation5 + $0x168] sm:$0xff]
    %v147 = vld [vmem:[#allocation5 + $0x170] sm:$0xff]
    %v148 = vld [vmem:[#allocation5 + $0x178] sm:$0xff]
    %v149 = vld [vmem:[#allocation5 + $0x180] sm:$0xff]
    %v150 = vld [vmem:[#allocation5 + $0x188] sm:$0xff]
    %v151 = vld [vmem:[#allocation5 + $0x190] sm:$0xff]
    %v152 = vld [vmem:[#allocation5 + $0x198] sm:$0xff]
    %v153 = vld [vmem:[#allocation5 + $0x1a0] sm:$0xff]
    %v154 = vld [vmem:[#allocation5 + $0x1a8] sm:$0xff]
    %v155 = vld [vmem:[#allocation5 + $0x1b0] sm:$0xff]
    %v156 = vld [vmem:[#allocation5 + $0x1b8] sm:$0xff]
    %v157 = vld [vmem:[#allocation5 + $0x1c0] sm:$0xff]
    %v158 = vld [vmem:[#allocation5 + $0x1c8] sm:$0xff]
    %v159 = vld [vmem:[#allocation5 + $0x1d0] sm:$0xff]
    %v160 = vld [vmem:[#allocation5 + $0x1d8] sm:$0xff]
    %v161 = vld [vmem:[#allocation5 + $0x1e0] sm:$0xff]
    %v162 = vld [vmem:[#allocation5 + $0x1e8] sm:$0xff]
    %v163 = vld [vmem:[#allocation5 + $0x1f0] sm:$0xff]
    %v164 = vld [vmem:[#allocation5 + $0x1f8] sm:$0xff]
    %v165 = vld [vmem:[#allocation5 + $0x200] sm:$0xff]
    %v166 = vld [vmem:[#allocation5 + $0x208] sm:$0xff]
    %v167 = vld [vmem:[#allocation5 + $0x210] sm:$0xff]
    %v168 = vld [vmem:[#allocation5 + $0x218] sm:$0xff]
    %v169 = vld [vmem:[#allocation5 + $0x220] sm:$0xff]
    %v170 = vld [vmem:[#allocation5 + $0x228] sm:$0xff]
    %v171 = vld [vmem:[#allocation5 + $0x230] sm:$0xff]
    %v172 = vld [vmem:[#allocation5 + $0x238] sm:$0xff]
    %v173 = vld [vmem:[#allocation5 + $0x240] sm:$0xff]
    %v174 = vld [vmem:[#allocation5 + $0x248] sm:$0xff]
    %v175 = vld [vmem:[#allocation5 + $0x250] sm:$0xff]
    %v176 = vld [vmem:[#allocation5 + $0x258] sm:$0xff]
    %v177 = vld [vmem:[#allocation5 + $0x260] sm:$0xff]
    %v178 = vld [vmem:[#allocation5 + $0x268] sm:$0xff]
    %v179 = vld [vmem:[#allocation5 + $0x270] sm:$0xff]
    %v180 = vld [vmem:[#allocation5 + $0x278] sm:$0xff]
    %v181 = vld [vmem:[#allocation5 + $0x280] sm:$0xff]
    %v182 = vld [vmem:[#allocation5 + $0x288] sm:$0xff]
    %v183 = vld [vmem:[#allocation5 + $0x290] sm:$0xff]
    %v184 = vld [vmem:[#allocation5 + $0x298] sm:$0xff]
    %v185 = vld [vmem:[#allocation5 + $0x2a0] sm:$0xff]
    %v186 = vld [vmem:[#allocation5 + $0x2a8] sm:$0xff]
    %v187 = vld [vmem:[#allocation5 + $0x2b0] sm:$0xff]
    %v188 = vld [vmem:[#allocation5 + $0x2b8] sm:$0xff]
    %v189 = vld [vmem:[#allocation5 + $0x2c0] sm:$0xff]
    %v190 = vld [vmem:[#allocation5 + $0x2c8] sm:$0xff]
    %v191 = vld [vmem:[#allocation5 + $0x2d0] sm:$0xff]
    %v192 = vld [vmem:[#allocation5 + $0x2d8] sm:$0xff]
    %v193 = vld [vmem:[#allocation5 + $0x2e0] sm:$0xff]
    %v194 = vld [vmem:[#allocation5 + $0x2e8] sm:$0xff]
    %v195 = vld [vmem:[#allocation5 + $0x2f0] sm:$0xff]
    %v196 = vld [vmem:[#allocation5 + $0x2f8] sm:$0xff]
    %v197 = vld [vmem:[%s2] sm:$0x7]
    %v199 = vlaneseq
    %v200 = vshrl.u32 %v199, 7
    %v201 = vsub.s32 0, %v200
    %v202 = vrot.slane %v197, %v201
    %v203 = vlaneseq
    %v204 = vshrl.u32 %v203, 7
    %v205 = vsub.s32 1, %v204
    %v206 = vrot.slane %v197, %v205
    %v207 = vlaneseq
    %v208 = vshrl.u32 %v207, 7
    %v209 = vsub.s32 2, %v208
    %v210 = vrot.slane %v197, %v209
    %214 = vmatprep.subr.mxu0 %v102
    %215 = vmatpush1.msra.mxu0 %v101
    %216 = vmatprep.subr.mxu0 %v105
    %217 = vmatpush1.msra.mxu0 %v104
    %218 = vmatprep.subr.mxu0 %v108
    %219 = vmatpush1.msra.mxu0 %v107
    %220 = vmatprep.subr.mxu0 %v111
    %221 = vmatpush1.msra.mxu0 %v110
    %222 = vmatprep.subr.mxu0 %v114
    %223 = vmatpush1.msra.mxu0 %v113
    %224 = vmatprep.subr.mxu0 %v117
    %225 = vmatpush1.msra.mxu0 %v116
    %226 = vmatprep.subr.mxu0 %v120
    %227 = vmatpush1.msra.mxu0 %v119
    %228 = vmatprep.subr.mxu0 %v123
    %229 = vmatpush1.msra.mxu0 %v122
    %230 = vmatprep.subr.mxu0 %v126
    %231 = vmatpush1.msra.mxu0 %v125
    %232 = vmatprep.subr.mxu0 %v129
    %233 = vmatpush1.msra.mxu0 %v128
    %234 = vmatprep.subr.mxu0 %v132
    %235 = vmatpush1.msra.mxu0 %v131
    %236 = vmatprep.subr.mxu0 %v135
    %237 = vmatpush1.msra.mxu0 %v134
    %238 = vmatprep.subr.mxu0 %v138
    %239 = vmatpush1.msra.mxu0 %v137
    %240 = vmatprep.subr.mxu0 %v141
    %241 = vmatpush1.msra.mxu0 %v140
    %242 = vmatprep.subr.mxu0 %v144
    %243 = vmatpush1.msra.mxu0 %v143
    %244 = vmatprep.subr.mxu0 %v147
    %245 = vmatpush1.msra.mxu0 %v146
    %246 = vmatprep.subr.mxu0 %v150
    %247 = vmatpush1.msra.mxu0 %v149
    %248 = vmatprep.subr.mxu0 %v153
    %249 = vmatpush1.msra.mxu0 %v152
    %250 = vmatprep.subr.mxu0 %v156
    %251 = vmatpush1.msra.mxu0 %v155
    %252 = vmatprep.subr.mxu0 %v159
    %253 = vmatpush1.msra.mxu0 %v158
    %254 = vmatprep.subr.mxu0 %v162
    %255 = vmatpush1.msra.mxu0 %v161
    %256 = vmatprep.subr.mxu0 %v165
    %257 = vmatpush1.msra.mxu0 %v164
    %258 = vmatprep.subr.mxu0 %v168
    %259 = vmatpush1.msra.mxu0 %v167
    %260 = vmatprep.subr.mxu0 %v171
    %261 = vmatpush1.msra.mxu0 %v170
    %262 = vmatprep.subr.mxu0 %v174
    %263 = vmatpush1.msra.mxu0 %v173
    %264 = vmatprep.subr.mxu0 %v177
    %265 = vmatpush1.msra.mxu0 %v176
    %266 = vmatprep.subr.mxu0 %v180
    %267 = vmatpush1.msra.mxu0 %v179
    %268 = vmatprep.subr.mxu0 %v183
    %269 = vmatpush1.msra.mxu0 %v182
    %270 = vmatprep.subr.mxu0 %v186
    %271 = vmatpush1.msra.mxu0 %v185
    %272 = vmatprep.subr.mxu0 %v189
    %273 = vmatpush1.msra.mxu0 %v188
    %274 = vmatprep.subr.mxu0 %v192
    %275 = vmatpush1.msra.mxu0 %v191
    %276 = vmatprep.subr.mxu0 %v195
    %277 = vmatpush1.msra.mxu0 %v194
    %278 = vmatprep.mubr.f32.mxu0 %v100
    %279 = vmatmul.mubr.f32.gmra.mrb[0].mxu0 %v99
    %v280 = vpop.f32.mrb[0].mxu0
    %v281 = vadd.f32 %v202, %v280
    %v282 = vpop.f32.mrb[0].mxu0
    %v283 = vadd.f32 %v206, %v282
    %284 = vdwg.mxu0
    %285 = vmatprep.subr.mxu0 0.0
    %286 = vmatpush1.msra.mxu0 %v103
    %287 = vmatprep.subr.mxu0 0.0
    %288 = vmatpush1.msra.mxu0 %v106
    %289 = vmatprep.subr.mxu0 0.0
    %290 = vmatpush1.msra.mxu0 %v109
    %291 = vmatprep.subr.mxu0 0.0
    %292 = vmatpush1.msra.mxu0 %v112
    %293 = vmatprep.subr.mxu0 0.0
    %294 = vmatpush1.msra.mxu0 %v115
    %295 = vmatprep.subr.mxu0 0.0
    %296 = vmatpush1.msra.mxu0 %v118
    %297 = vmatprep.subr.mxu0 0.0
    %298 = vmatpush1.msra.mxu0 %v121
    %299 = vmatprep.subr.mxu0 0.0
    %300 = vmatpush1.msra.mxu0 %v124
    %301 = vmatprep.subr.mxu0 0.0
    %302 = vmatpush1.msra.mxu0 %v127
    %303 = vmatprep.subr.mxu0 0.0
    %304 = vmatpush1.msra.mxu0 %v130
    %305 = vmatprep.subr.mxu0 0.0
    %306 = vmatpush1.msra.mxu0 %v133
    %307 = vmatprep.subr.mxu0 0.0
    %308 = vmatpush1.msra.mxu0 %v136
    %309 = vmatprep.subr.mxu0 0.0
    %310 = vmatpush1.msra.mxu0 %v139
    %311 = vmatprep.subr.mxu0 0.0
    %312 = vmatpush1.msra.mxu0 %v142
    %313 = vmatprep.subr.mxu0 0.0
    %314 = vmatpush1.msra.mxu0 %v145
    %315 = vmatprep.subr.mxu0 0.0
    %316 = vmatpush1.msra.mxu0 %v148
    %317 = vmatprep.subr.mxu0 0.0
    %318 = vmatpush1.msra.mxu0 %v151
    %319 = vmatprep.subr.mxu0 0.0
    %320 = vmatpush1.msra.mxu0 %v154
    %321 = vmatprep.subr.mxu0 0.0
    %322 = vmatpush1.msra.mxu0 %v157
    %323 = vmatprep.subr.mxu0 0.0
    %324 = vmatpush1.msra.mxu0 %v160
    %325 = vmatprep.subr.mxu0 0.0
    %326 = vmatpush1.msra.mxu0 %v163
    %327 = vmatprep.subr.mxu0 0.0
    %328 = vmatpush1.msra.mxu0 %v166
    %329 = vmatprep.subr.mxu0 0.0
    %330 = vmatpush1.msra.mxu0 %v169
    %331 = vmatprep.subr.mxu0 0.0
    %332 = vmatpush1.msra.mxu0 %v172
    %333 = vmatprep.subr.mxu0 0.0
    %334 = vmatpush1.msra.mxu0 %v175
    %335 = vmatprep.subr.mxu0 0.0
    %336 = vmatpush1.msra.mxu0 %v178
    %337 = vmatprep.subr.mxu0 0.0
    %338 = vmatpush1.msra.mxu0 %v181
    %339 = vmatprep.subr.mxu0 0.0
    %340 = vmatpush1.msra.mxu0 %v184
    %341 = vmatprep.subr.mxu0 0.0
    %342 = vmatpush1.msra.mxu0 %v187
    %343 = vmatprep.subr.mxu0 0.0
    %344 = vmatpush1.msra.mxu0 %v190
    %345 = vmatprep.subr.mxu0 0.0
    %346 = vmatpush1.msra.mxu0 %v193
    %347 = vmatprep.subr.mxu0 0.0
    %348 = vmatpush1.msra.mxu0 %v196
    %349 = vmatprep.mubr.f32.mxu0 %v100
    %350 = vmatmul.mubr.f32.gmra.mrb[0].mxu0 %v99
    %v351 = vpop.f32.mrb[0].mxu0
    %v352 = vadd.f32 %v210, %v351
    %v353 = vpop.f32.mrb[0].mxu0
    %354 = vdwg.mxu0
    %v355 = vmax.f32 %v281, 0.0
    %v356 = vmax.f32 %v283, 0.0
    %v357 = vmax.f32 %v352, 0.0
    %v358 = vld [vmem:[#allocation7] sm:$0xff]
    %v359 = vld [vmem:[#allocation7 + $0x8] sm:$0xff]
    %v360 = vld [vmem:[#allocation7 + $0x10] sm:$0xff]
    %v361 = vld [vmem:[#allocation7 + $0x18] sm:$0xff]
    %v362 = vld [vmem:[#allocation7 + $0x20] sm:$0xff]
    %v363 = vld [vmem:[#allocation7 + $0x28] sm:$0xff]
    %v364 = vld [vmem:[#allocation7 + $0x30] sm:$0xff]
    %v365 = vld [vmem:[#allocation7 + $0x38] sm:$0xff]
    %v366 = vld [vmem:[#allocation7 + $0x40] sm:$0xff]
    %v367 = vld [vmem:[#allocation7 + $0x48] sm:$0xff]
    %v368 = vld [vmem:[#allocation7 + $0x50] sm:$0xff]
    %v369 = vld [vmem:[#allocation7 + $0x58] sm:$0xff]
    %v370 = vld [vmem:[#allocation7 + $0x60] sm:$0xff]
    %v371 = vld [vmem:[#allocation7 + $0x68] sm:$0xff]
    %v372 = vld [vmem:[#allocation7 + $0x70] sm:$0xff]
    %v373 = vld [vmem:[#allocation7 + $0x78] sm:$0xff]
    %v374 = vld [vmem:[#allocation7 + $0x80] sm:$0xff]
    %v375 = vld [vmem:[#allocation7 + $0x88] sm:$0xff]
    %v376 = vld [vmem:[#allocation7 + $0x90] sm:$0xff]
    %v377 = vld [vmem:[#allocation7 + $0x98] sm:$0xff]
    %v378 = vld [vmem:[#allocation7 + $0xa0] sm:$0xff]
    %v379 = vld [vmem:[#allocation7 + $0xa8] sm:$0xff]
    %v380 = vld [vmem:[#allocation7 + $0xb0] sm:$0xff]
    %v381 = vld [vmem:[#allocation7 + $0xb8] sm:$0xff]
    %v382 = vld [vmem:[#allocation7 + $0xc0] sm:$0xff]
    %v383 = vld [vmem:[#allocation7 + $0xc8] sm:$0xff]
    %v384 = vld [vmem:[#allocation7 + $0xd0] sm:$0xff]
    %v385 = vld [vmem:[#allocation7 + $0xd8] sm:$0xff]
    %v386 = vld [vmem:[#allocation7 + $0xe0] sm:$0xff]
    %v387 = vld [vmem:[#allocation7 + $0xe8] sm:$0xff]
    %v388 = vld [vmem:[#allocation7 + $0xf0] sm:$0xff]
    %v389 = vld [vmem:[#allocation7 + $0xf8] sm:$0xff]
    %v390 = vld [vmem:[#allocation7 + $0x100] sm:$0xff]
    %v391 = vld [vmem:[#allocation7 + $0x108] sm:$0xff]
    %v392 = vld [vmem:[#allocation7 + $0x110] sm:$0xff]
    %v393 = vld [vmem:[#allocation7 + $0x118] sm:$0xff]
    %v394 = vld [vmem:[#allocation7 + $0x120] sm:$0xff]
    %v395 = vld [vmem:[#allocation7 + $0x128] sm:$0xff]
    %v396 = vld [vmem:[#allocation7 + $0x130] sm:$0xff]
    %v397 = vld [vmem:[#allocation7 + $0x138] sm:$0xff]
    %v398 = vld [vmem:[#allocation7 + $0x140] sm:$0xff]
    %v399 = vld [vmem:[#allocation7 + $0x148] sm:$0xff]
    %v400 = vld [vmem:[#allocation7 + $0x150] sm:$0xff]
    %v401 = vld [vmem:[#allocation7 + $0x158] sm:$0xff]
    %v402 = vld [vmem:[#allocation7 + $0x160] sm:$0xff]
    %v403 = vld [vmem:[#allocation7 + $0x168] sm:$0xff]
    %v404 = vld [vmem:[#allocation7 + $0x170] sm:$0xff]
    %v405 = vld [vmem:[#allocation7 + $0x178] sm:$0xff]
    %v406 = vld [vmem:[#allocation7 + $0x180] sm:$0xff]
    %v407 = vld [vmem:[#allocation7 + $0x188] sm:$0xff]
    %v408 = vld [vmem:[#allocation7 + $0x190] sm:$0xff]
    %v409 = vld [vmem:[#allocation7 + $0x198] sm:$0xff]
    %v410 = vld [vmem:[#allocation7 + $0x1a0] sm:$0xff]
    %v411 = vld [vmem:[#allocation7 + $0x1a8] sm:$0xff]
    %v412 = vld [vmem:[#allocation7 + $0x1b0] sm:$0xff]
    %v413 = vld [vmem:[#allocation7 + $0x1b8] sm:$0xff]
    %v414 = vld [vmem:[#allocation7 + $0x1c0] sm:$0xff]
    %v415 = vld [vmem:[#allocation7 + $0x1c8] sm:$0xff]
    %v416 = vld [vmem:[#allocation7 + $0x1d0] sm:$0xff]
    %v417 = vld [vmem:[#allocation7 + $0x1d8] sm:$0xff]
    %v418 = vld [vmem:[#allocation7 + $0x1e0] sm:$0xff]
    %v419 = vld [vmem:[#allocation7 + $0x1e8] sm:$0xff]
    %v420 = vld [vmem:[#allocation7 + $0x1f0] sm:$0xff]
    %v421 = vld [vmem:[#allocation7 + $0x1f8] sm:$0xff]
    %v422 = vld [vmem:[#allocation7 + $0x200] sm:$0xff]
    %v423 = vld [vmem:[#allocation7 + $0x208] sm:$0xff]
    %v424 = vld [vmem:[#allocation7 + $0x210] sm:$0xff]
    %v425 = vld [vmem:[#allocation7 + $0x218] sm:$0xff]
    %v426 = vld [vmem:[#allocation7 + $0x220] sm:$0xff]
    %v427 = vld [vmem:[#allocation7 + $0x228] sm:$0xff]
    %v428 = vld [vmem:[#allocation7 + $0x230] sm:$0xff]
    %v429 = vld [vmem:[#allocation7 + $0x238] sm:$0xff]
    %v430 = vld [vmem:[#allocation7 + $0x240] sm:$0xff]
    %v431 = vld [vmem:[#allocation7 + $0x248] sm:$0xff]
    %v432 = vld [vmem:[#allocation7 + $0x250] sm:$0xff]
    %v433 = vld [vmem:[#allocation7 + $0x258] sm:$0xff]
    %v434 = vld [vmem:[#allocation7 + $0x260] sm:$0xff]
    %v435 = vld [vmem:[#allocation7 + $0x268] sm:$0xff]
    %v436 = vld [vmem:[#allocation7 + $0x270] sm:$0xff]
    %v437 = vld [vmem:[#allocation7 + $0x278] sm:$0xff]
    %v438 = vld [vmem:[#allocation7 + $0x280] sm:$0xff]
    %v439 = vld [vmem:[#allocation7 + $0x288] sm:$0xff]
    %v440 = vld [vmem:[#allocation7 + $0x290] sm:$0xff]
    %v441 = vld [vmem:[#allocation7 + $0x298] sm:$0xff]
    %v442 = vld [vmem:[#allocation7 + $0x2a0] sm:$0xff]
    %v443 = vld [vmem:[#allocation7 + $0x2a8] sm:$0xff]
    %v444 = vld [vmem:[#allocation7 + $0x2b0] sm:$0xff]
    %v445 = vld [vmem:[#allocation7 + $0x2b8] sm:$0xff]
    %v446 = vld [vmem:[#allocation7 + $0x2c0] sm:$0xff]
    %v447 = vld [vmem:[#allocation7 + $0x2c8] sm:$0xff]
    %v448 = vld [vmem:[#allocation7 + $0x2d0] sm:$0xff]
    %v449 = vld [vmem:[#allocation7 + $0x2d8] sm:$0xff]
    %v450 = vld [vmem:[#allocation7 + $0x2e0] sm:$0xff]
    %v451 = vld [vmem:[#allocation7 + $0x2e8] sm:$0xff]
    %v452 = vld [vmem:[#allocation7 + $0x2f0] sm:$0xff]
    %v453 = vld [vmem:[#allocation7 + $0x2f8] sm:$0xff]
    %v454 = vld [vmem:[#allocation7 + $0x300] sm:$0xff]
    %v455 = vld [vmem:[#allocation7 + $0x308] sm:$0xff]
    %v456 = vld [vmem:[#allocation7 + $0x310] sm:$0xff]
    %v457 = vld [vmem:[#allocation7 + $0x318] sm:$0xff]
    %v458 = vld [vmem:[#allocation7 + $0x320] sm:$0xff]
    %v459 = vld [vmem:[#allocation7 + $0x328] sm:$0xff]
    %v460 = vld [vmem:[#allocation7 + $0x330] sm:$0xff]
    %v461 = vld [vmem:[#allocation7 + $0x338] sm:$0xff]
    %v462 = vld [vmem:[#allocation7 + $0x340] sm:$0xff]
    %v463 = vld [vmem:[#allocation7 + $0x348] sm:$0xff]
    %v464 = vld [vmem:[#allocation7 + $0x350] sm:$0xff]
    %v465 = vld [vmem:[#allocation7 + $0x358] sm:$0xff]
    %v466 = vld [vmem:[#allocation7 + $0x360] sm:$0xff]
    %v467 = vld [vmem:[#allocation7 + $0x368] sm:$0xff]
    %v468 = vld [vmem:[#allocation7 + $0x370] sm:$0xff]
    %v469 = vld [vmem:[#allocation7 + $0x378] sm:$0xff]
    %v470 = vld [vmem:[#allocation7 + $0x380] sm:$0xff]
    %v471 = vld [vmem:[#allocation7 + $0x388] sm:$0xff]
    %v472 = vld [vmem:[#allocation7 + $0x390] sm:$0xff]
    %v473 = vld [vmem:[#allocation7 + $0x398] sm:$0xff]
    %v474 = vld [vmem:[#allocation7 + $0x3a0] sm:$0xff]
    %v475 = vld [vmem:[#allocation7 + $0x3a8] sm:$0xff]
    %v476 = vld [vmem:[#allocation7 + $0x3b0] sm:$0xff]
    %v477 = vld [vmem:[#allocation7 + $0x3b8] sm:$0xff]
    %v478 = vld [vmem:[#allocation7 + $0x3c0] sm:$0xff]
    %v479 = vld [vmem:[#allocation7 + $0x3c8] sm:$0xff]
    %v480 = vld [vmem:[#allocation7 + $0x3d0] sm:$0xff]
    %v481 = vld [vmem:[#allocation7 + $0x3d8] sm:$0xff]
    %v482 = vld [vmem:[#allocation7 + $0x3e0] sm:$0xff]
    %v483 = vld [vmem:[#allocation7 + $0x3e8] sm:$0xff]
    %v484 = vld [vmem:[#allocation7 + $0x3f0] sm:$0xff]
    %v485 = vld [vmem:[#allocation7 + $0x3f8] sm:$0xff]
    %v486 = vld [vmem:[#allocation7 + $0x400] sm:$0xff]
    %v487 = vld [vmem:[#allocation7 + $0x408] sm:$0xff]
    %v488 = vld [vmem:[#allocation7 + $0x410] sm:$0xff]
    %v489 = vld [vmem:[#allocation7 + $0x418] sm:$0xff]
    %v490 = vld [vmem:[#allocation7 + $0x420] sm:$0xff]
    %v491 = vld [vmem:[#allocation7 + $0x428] sm:$0xff]
    %v492 = vld [vmem:[#allocation7 + $0x430] sm:$0xff]
    %v493 = vld [vmem:[#allocation7 + $0x438] sm:$0xff]
    %v494 = vld [vmem:[#allocation7 + $0x440] sm:$0xff]
    %v495 = vld [vmem:[#allocation7 + $0x448] sm:$0xff]
    %v496 = vld [vmem:[#allocation7 + $0x450] sm:$0xff]
    %v497 = vld [vmem:[#allocation7 + $0x458] sm:$0xff]
    %v498 = vld [vmem:[#allocation7 + $0x460] sm:$0xff]
    %v499 = vld [vmem:[#allocation7 + $0x468] sm:$0xff]
    %v500 = vld [vmem:[#allocation7 + $0x470] sm:$0xff]
    %v501 = vld [vmem:[#allocation7 + $0x478] sm:$0xff]
    %v502 = vld [vmem:[%s4] sm:$0x7]
    %v504 = vlaneseq
    %v505 = vshrl.u32 %v504, 7
    %v506 = vsub.s32 0, %v505
    %v507 = vrot.slane %v502, %v506
    %v508 = vlaneseq
    %v509 = vshrl.u32 %v508, 7
    %v510 = vsub.s32 1, %v509
    %v511 = vrot.slane %v502, %v510
    %v512 = vlaneseq
    %v513 = vshrl.u32 %v512, 7
    %v514 = vsub.s32 2, %v513
    %v515 = vrot.slane %v502, %v514
    %519 = vmatprep.subr.mxu0 %v359
    %520 = vmatpush1.msra.mxu0 %v358
    %521 = vmatprep.subr.mxu0 %v362
    %522 = vmatpush1.msra.mxu0 %v361
    %523 = vmatprep.subr.mxu0 %v365
    %524 = vmatpush1.msra.mxu0 %v364
    %525 = vmatprep.subr.mxu0 %v368
    %526 = vmatpush1.msra.mxu0 %v367
    %527 = vmatprep.subr.mxu0 %v371
    %528 = vmatpush1.msra.mxu0 %v370
    %529 = vmatprep.subr.mxu0 %v374
    %530 = vmatpush1.msra.mxu0 %v373
    %531 = vmatprep.subr.mxu0 %v377
    %532 = vmatpush1.msra.mxu0 %v376
    %533 = vmatprep.subr.mxu0 %v380
    %534 = vmatpush1.msra.mxu0 %v379
    %535 = vmatprep.subr.mxu0 %v383
    %536 = vmatpush1.msra.mxu0 %v382
    %537 = vmatprep.subr.mxu0 %v386
    %538 = vmatpush1.msra.mxu0 %v385
    %539 = vmatprep.subr.mxu0 %v389
    %540 = vmatpush1.msra.mxu0 %v388
    %541 = vmatprep.subr.mxu0 %v392
    %542 = vmatpush1.msra.mxu0 %v391
    %543 = vmatprep.subr.mxu0 %v395
    %544 = vmatpush1.msra.mxu0 %v394
    %545 = vmatprep.subr.mxu0 %v398
    %546 = vmatpush1.msra.mxu0 %v397
    %547 = vmatprep.subr.mxu0 %v401
    %548 = vmatpush1.msra.mxu0 %v400
    %549 = vmatprep.subr.mxu0 %v404
    %550 = vmatpush1.msra.mxu0 %v403
    %551 = vmatprep.subr.mxu0 %v407
    %552 = vmatpush1.msra.mxu0 %v406
    %553 = vmatprep.subr.mxu0 %v410
    %554 = vmatpush1.msra.mxu0 %v409
    %555 = vmatprep.subr.mxu0 %v413
    %556 = vmatpush1.msra.mxu0 %v412
    %557 = vmatprep.subr.mxu0 %v416
    %558 = vmatpush1.msra.mxu0 %v415
    %559 = vmatprep.subr.mxu0 %v419
    %560 = vmatpush1.msra.mxu0 %v418
    %561 = vmatprep.subr.mxu0 %v422
    %562 = vmatpush1.msra.mxu0 %v421
    %563 = vmatprep.subr.mxu0 %v425
    %564 = vmatpush1.msra.mxu0 %v424
    %565 = vmatprep.subr.mxu0 %v428
    %566 = vmatpush1.msra.mxu0 %v427
    %567 = vmatprep.subr.mxu0 %v431
    %568 = vmatpush1.msra.mxu0 %v430
    %569 = vmatprep.subr.mxu0 %v434
    %570 = vmatpush1.msra.mxu0 %v433
    %571 = vmatprep.subr.mxu0 %v437
    %572 = vmatpush1.msra.mxu0 %v436
    %573 = vmatprep.subr.mxu0 %v440
    %574 = vmatpush1.msra.mxu0 %v439
    %575 = vmatprep.subr.mxu0 %v443
    %576 = vmatpush1.msra.mxu0 %v442
    %577 = vmatprep.subr.mxu0 %v446
    %578 = vmatpush1.msra.mxu0 %v445
    %579 = vmatprep.subr.mxu0 %v449
    %580 = vmatpush1.msra.mxu0 %v448
    %581 = vmatprep.subr.mxu0 %v452
    %582 = vmatpush1.msra.mxu0 %v451
    %583 = vmatprep.mubr.f32.mxu0 %v356
    %584 = vmatmul.mubr.f32.gmra.mrb[0].mxu0 %v355
    %v585 = vpop.f32.mrb[0].mxu0
    %v586 = vadd.f32 %v507, %v585
    %v587 = vpop.f32.mrb[0].mxu0
    %v588 = vadd.f32 %v511, %v587
    %589 = vdwg.mxu0
    %590 = vmatprep.subr.mxu0 %v455
    %591 = vmatpush1.msra.mxu0 %v454
    %592 = vmatprep.subr.mxu0 %v458
    %593 = vmatpush1.msra.mxu0 %v457
    %594 = vmatprep.subr.mxu0 %v461
    %595 = vmatpush1.msra.mxu0 %v460
    %596 = vmatprep.subr.mxu0 %v464
    %597 = vmatpush1.msra.mxu0 %v463
    %598 = vmatprep.subr.mxu0 %v467
    %599 = vmatpush1.msra.mxu0 %v466
    %600 = vmatprep.subr.mxu0 %v470
    %601 = vmatpush1.msra.mxu0 %v469
    %602 = vmatprep.subr.mxu0 %v473
    %603 = vmatpush1.msra.mxu0 %v472
    %604 = vmatprep.subr.mxu0 %v476
    %605 = vmatpush1.msra.mxu0 %v475
    %606 = vmatprep.subr.mxu0 %v479
    %607 = vmatpush1.msra.mxu0 %v478
    %608 = vmatprep.subr.mxu0 %v482
    %609 = vmatpush1.msra.mxu0 %v481
    %610 = vmatprep.subr.mxu0 %v485
    %611 = vmatpush1.msra.mxu0 %v484
    %612 = vmatprep.subr.mxu0 %v488
    %613 = vmatpush1.msra.mxu0 %v487
    %614 = vmatprep.subr.mxu0 %v491
    %615 = vmatpush1.msra.mxu0 %v490
    %616 = vmatprep.subr.mxu0 %v494
    %617 = vmatpush1.msra.mxu0 %v493
    %618 = vmatprep.subr.mxu0 %v497
    %619 = vmatpush1.msra.mxu0 %v496
    %620 = vmatprep.subr.mxu0 %v500
    %621 = vmatpush1.msra.mxu0 %v499
    %622 = vmatprep.subr.mxu0 0.0
    %623 = vmatpush1.msra.mxu0 0.0
    %624 = vmatprep.subr.mxu0 0.0
    %625 = vmatpush1.msra.mxu0 0.0
    %626 = vmatprep.subr.mxu0 0.0
    %627 = vmatpush1.msra.mxu0 0.0
    %628 = vmatprep.subr.mxu0 0.0
    %629 = vmatpush1.msra.mxu0 0.0
    %630 = vmatprep.subr.mxu0 0.0
    %631 = vmatpush1.msra.mxu0 0.0
    %632 = vmatprep.subr.mxu0 0.0
    %633 = vmatpush1.msra.mxu0 0.0
    %634 = vmatprep.subr.mxu0 0.0
    %635 = vmatpush1.msra.mxu0 0.0
    %636 = vmatprep.subr.mxu0 0.0
    %637 = vmatpush1.msra.mxu0 0.0
    %638 = vmatprep.subr.mxu0 0.0
    %639 = vmatpush1.msra.mxu0 0.0
    %640 = vmatprep.subr.mxu0 0.0
    %641 = vmatpush1.msra.mxu0 0.0
    %642 = vmatprep.subr.mxu0 0.0
    %643 = vmatpush1.msra.mxu0 0.0
    %644 = vmatprep.subr.mxu0 0.0
    %645 = vmatpush1.msra.mxu0 0.0
    %646 = vmatprep.subr.mxu0 0.0
    %647 = vmatpush1.msra.mxu0 0.0
    %648 = vmatprep.subr.mxu0 0.0
    %649 = vmatpush1.msra.mxu0 0.0
    %650 = vmatprep.subr.mxu0 0.0
    %651 = vmatpush1.msra.mxu0 0.0
    %652 = vmatprep.subr.mxu0 0.0
    %653 = vmatpush1.msra.mxu0 0.0
    %654 = vmatprep.mubr.f32.mxu0 0.0
    %655 = vmatmul.mubr.f32.gmra.mrb[0].mxu0 %v357
    %v656 = vpop.f32.mrb[0].mxu0
    %v657 = vadd.f32 %v586, %v656
    %v658 = vpop.f32.mrb[0].mxu0
    %v659 = vadd.f32 %v588, %v658
    %660 = vdwg.mxu0
    %661 = vmatprep.subr.mxu0 0.0
    %662 = vmatpush1.msra.mxu0 %v360
    %663 = vmatprep.subr.mxu0 0.0
    %664 = vmatpush1.msra.mxu0 %v363
    %665 = vmatprep.subr.mxu0 0.0
    %666 = vmatpush1.msra.mxu0 %v366
    %667 = vmatprep.subr.mxu0 0.0
    %668 = vmatpush1.msra.mxu0 %v369
    %669 = vmatprep.subr.mxu0 0.0
    %670 = vmatpush1.msra.mxu0 %v372
    %671 = vmatprep.subr.mxu0 0.0
    %672 = vmatpush1.msra.mxu0 %v375
    %673 = vmatprep.subr.mxu0 0.0
    %674 = vmatpush1.msra.mxu0 %v378
    %675 = vmatprep.subr.mxu0 0.0
    %676 = vmatpush1.msra.mxu0 %v381
    %677 = vmatprep.subr.mxu0 0.0
    %678 = vmatpush1.msra.mxu0 %v384
    %679 = vmatprep.subr.mxu0 0.0
    %680 = vmatpush1.msra.mxu0 %v387
    %681 = vmatprep.subr.mxu0 0.0
    %682 = vmatpush1.msra.mxu0 %v390
    %683 = vmatprep.subr.mxu0 0.0
    %684 = vmatpush1.msra.mxu0 %v393
    %685 = vmatprep.subr.mxu0 0.0
    %686 = vmatpush1.msra.mxu0 %v396
    %687 = vmatprep.subr.mxu0 0.0
    %688 = vmatpush1.msra.mxu0 %v399
    %689 = vmatprep.subr.mxu0 0.0
    %690 = vmatpush1.msra.mxu0 %v402
    %691 = vmatprep.subr.mxu0 0.0
    %692 = vmatpush1.msra.mxu0 %v405
    %693 = vmatprep.subr.mxu0 0.0
    %694 = vmatpush1.msra.mxu0 %v408
    %695 = vmatprep.subr.mxu0 0.0
    %696 = vmatpush1.msra.mxu0 %v411
    %697 = vmatprep.subr.mxu0 0.0
    %698 = vmatpush1.msra.mxu0 %v414
    %699 = vmatprep.subr.mxu0 0.0
    %700 = vmatpush1.msra.mxu0 %v417
    %701 = vmatprep.subr.mxu0 0.0
    %702 = vmatpush1.msra.mxu0 %v420
    %703 = vmatprep.subr.mxu0 0.0
    %704 = vmatpush1.msra.mxu0 %v423
    %705 = vmatprep.subr.mxu0 0.0
    %706 = vmatpush1.msra.mxu0 %v426
    %707 = vmatprep.subr.mxu0 0.0
    %708 = vmatpush1.msra.mxu0 %v429
    %709 = vmatprep.subr.mxu0 0.0
    %710 = vmatpush1.msra.mxu0 %v432
    %711 = vmatprep.subr.mxu0 0.0
    %712 = vmatpush1.msra.mxu0 %v435
    %713 = vmatprep.subr.mxu0 0.0
    %714 = vmatpush1.msra.mxu0 %v438
    %715 = vmatprep.subr.mxu0 0.0
    %716 = vmatpush1.msra.mxu0 %v441
    %717 = vmatprep.subr.mxu0 0.0
    %718 = vmatpush1.msra.mxu0 %v444
    %719 = vmatprep.subr.mxu0 0.0
    %720 = vmatpush1.msra.mxu0 %v447
    %721 = vmatprep.subr.mxu0 0.0
    %722 = vmatpush1.msra.mxu0 %v450
    %723 = vmatprep.subr.mxu0 0.0
    %724 = vmatpush1.msra.mxu0 %v453
    %725 = vmatprep.mubr.f32.mxu0 %v356
    %726 = vmatmul.mubr.f32.gmra.mrb[0].mxu0 %v355
    %v727 = vpop.f32.mrb[0].mxu0
    %v728 = vadd.f32 %v515, %v727
    %v729 = vpop.f32.mrb[0].mxu0
    %730 = vdwg.mxu0
    %731 = vmatprep.subr.mxu0 0.0
    %732 = vmatpush1.msra.mxu0 %v456
    %733 = vmatprep.subr.mxu0 0.0
    %734 = vmatpush1.msra.mxu0 %v459
    %735 = vmatprep.subr.mxu0 0.0
    %736 = vmatpush1.msra.mxu0 %v462
    %737 = vmatprep.subr.mxu0 0.0
    %738 = vmatpush1.msra.mxu0 %v465
    %739 = vmatprep.subr.mxu0 0.0
    %740 = vmatpush1.msra.mxu0 %v468
    %741 = vmatprep.subr.mxu0 0.0
    %742 = vmatpush1.msra.mxu0 %v471
    %743 = vmatprep.subr.mxu0 0.0
    %744 = vmatpush1.msra.mxu0 %v474
    %745 = vmatprep.subr.mxu0 0.0
    %746 = vmatpush1.msra.mxu0 %v477
    %747 = vmatprep.subr.mxu0 0.0
    %748 = vmatpush1.msra.mxu0 %v480
    %749 = vmatprep.subr.mxu0 0.0
    %750 = vmatpush1.msra.mxu0 %v483
    %751 = vmatprep.subr.mxu0 0.0
    %752 = vmatpush1.msra.mxu0 %v486
    %753 = vmatprep.subr.mxu0 0.0
    %754 = vmatpush1.msra.mxu0 %v489
    %755 = vmatprep.subr.mxu0 0.0
    %756 = vmatpush1.msra.mxu0 %v492
    %757 = vmatprep.subr.mxu0 0.0
    %758 = vmatpush1.msra.mxu0 %v495
    %759 = vmatprep.subr.mxu0 0.0
    %760 = vmatpush1.msra.mxu0 %v498
    %761 = vmatprep.subr.mxu0 0.0
    %762 = vmatpush1.msra.mxu0 %v501
    %763 = vmatprep.subr.mxu0 0.0
    %764 = vmatpush1.msra.mxu0 0.0
    %765 = vmatprep.subr.mxu0 0.0
    %766 = vmatpush1.msra.mxu0 0.0
    %767 = vmatprep.subr.mxu0 0.0
    %768 = vmatpush1.msra.mxu0 0.0
    %769 = vmatprep.subr.mxu0 0.0
    %770 = vmatpush1.msra.mxu0 0.0
    %771 = vmatprep.subr.mxu0 0.0
    %772 = vmatpush1.msra.mxu0 0.0
    %773 = vmatprep.subr.mxu0 0.0
    %774 = vmatpush1.msra.mxu0 0.0
    %775 = vmatprep.subr.mxu0 0.0
    %776 = vmatpush1.msra.mxu0 0.0
    %777 = vmatprep.subr.mxu0 0.0
    %778 = vmatpush1.msra.mxu0 0.0
    %779 = vmatprep.subr.mxu0 0.0
    %780 = vmatpush1.msra.mxu0 0.0
    %781 = vmatprep.subr.mxu0 0.0
    %782 = vmatpush1.msra.mxu0 0.0
    %783 = vmatprep.subr.mxu0 0.0
    %784 = vmatpush1.msra.mxu0 0.0
    %785 = vmatprep.subr.mxu0 0.0
    %786 = vmatpush1.msra.mxu0 0.0
    %787 = vmatprep.subr.mxu0 0.0
    %788 = vmatpush1.msra.mxu0 0.0
    %789 = vmatprep.subr.mxu0 0.0
    %790 = vmatpush1.msra.mxu0 0.0
    %791 = vmatprep.subr.mxu0 0.0
    %792 = vmatpush1.msra.mxu0 0.0
    %793 = vmatprep.subr.mxu0 0.0
    %794 = vmatpush1.msra.mxu0 0.0
    %795 = vmatprep.mubr.f32.mxu0 0.0
    %796 = vmatmul.mubr.f32.gmra.mrb[0].mxu0 %v357
    %v797 = vpop.f32.mrb[0].mxu0
    %v798 = vadd.f32 %v728, %v797
    %v799 = vpop.f32.mrb[0].mxu0
    %800 = vdwg.mxu0
    %v801 = vmax.f32 %v657, 0.0
    %v802 = vmax.f32 %v659, 0.0
    %v803 = vmax.f32 %v798, 0.0
    %v804 = vld [vmem:[#allocation8] sm:$0xff]
    %v805 = vld [vmem:[#allocation8 + $0x8] sm:$0xff]
    %v806 = vld [vmem:[#allocation8 + $0x10] sm:$0xff]
    %v807 = vld [vmem:[#allocation8 + $0x18] sm:$0xff]
    %v808 = vld [vmem:[#allocation8 + $0x20] sm:$0xff]
    %v809 = vld [vmem:[#allocation8 + $0x28] sm:$0xff]
    %v810 = vld [vmem:[#allocation8 + $0x30] sm:$0xff]
    %v811 = vld [vmem:[#allocation8 + $0x38] sm:$0xff]
    %v812 = vld [vmem:[#allocation8 + $0x40] sm:$0xff]
    %v813 = vld [vmem:[#allocation8 + $0x48] sm:$0xff]
    %v814 = vld [vmem:[#allocation8 + $0x50] sm:$0xff]
    %v815 = vld [vmem:[#allocation8 + $0x58] sm:$0xff]
    %v816 = vld [vmem:[#allocation8 + $0x60] sm:$0xff]
    %v817 = vld [vmem:[#allocation8 + $0x68] sm:$0xff]
    %v818 = vld [vmem:[#allocation8 + $0x70] sm:$0xff]
    %v819 = vld [vmem:[#allocation8 + $0x78] sm:$0xff]
    %v820 = vld [vmem:[#allocation8 + $0x80] sm:$0xff]
    %v821 = vld [vmem:[#allocation8 + $0x88] sm:$0xff]
    %v822 = vld [vmem:[#allocation8 + $0x90] sm:$0xff]
    %v823 = vld [vmem:[#allocation8 + $0x98] sm:$0xff]
    %v824 = vld [vmem:[#allocation8 + $0xa0] sm:$0xff]
    %v825 = vld [vmem:[#allocation8 + $0xa8] sm:$0xff]
    %v826 = vld [vmem:[#allocation8 + $0xb0] sm:$0xff]
    %v827 = vld [vmem:[#allocation8 + $0xb8] sm:$0xff]
    %v828 = vld [vmem:[#allocation8 + $0xc0] sm:$0xff]
    %v829 = vld [vmem:[#allocation8 + $0xc8] sm:$0xff]
    %v830 = vld [vmem:[#allocation8 + $0xd0] sm:$0xff]
    %v831 = vld [vmem:[#allocation8 + $0xd8] sm:$0xff]
    %v832 = vld [vmem:[#allocation8 + $0xe0] sm:$0xff]
    %v833 = vld [vmem:[#allocation8 + $0xe8] sm:$0xff]
    %v834 = vld [vmem:[#allocation8 + $0xf0] sm:$0xff]
    %v835 = vld [vmem:[#allocation8 + $0xf8] sm:$0xff]
    %v836 = vld [vmem:[#allocation8 + $0x100] sm:$0xff]
    %v837 = vld [vmem:[#allocation8 + $0x108] sm:$0xff]
    %v838 = vld [vmem:[#allocation8 + $0x110] sm:$0xff]
    %v839 = vld [vmem:[#allocation8 + $0x118] sm:$0xff]
    %v840 = vld [vmem:[#allocation8 + $0x120] sm:$0xff]
    %v841 = vld [vmem:[#allocation8 + $0x128] sm:$0xff]
    %v842 = vld [vmem:[#allocation8 + $0x130] sm:$0xff]
    %v843 = vld [vmem:[#allocation8 + $0x138] sm:$0xff]
    %v844 = vld [vmem:[#allocation8 + $0x140] sm:$0xff]
    %v845 = vld [vmem:[#allocation8 + $0x148] sm:$0xff]
    %v846 = vld [vmem:[#allocation8 + $0x150] sm:$0xff]
    %v847 = vld [vmem:[#allocation8 + $0x158] sm:$0xff]
    %v848 = vld [vmem:[#allocation8 + $0x160] sm:$0xff]
    %v849 = vld [vmem:[#allocation8 + $0x168] sm:$0xff]
    %v850 = vld [vmem:[#allocation8 + $0x170] sm:$0xff]
    %v851 = vld [vmem:[#allocation8 + $0x178] sm:$0xff]
    %v852 = vld [vmem:[#allocation8 + $0x180] sm:$0xff]
    %v853 = vld [vmem:[#allocation8 + $0x188] sm:$0xff]
    %v854 = vld [vmem:[#allocation8 + $0x190] sm:$0xff]
    %v855 = vld [vmem:[#allocation8 + $0x198] sm:$0xff]
    %v856 = vld [vmem:[#allocation8 + $0x1a0] sm:$0xff]
    %v857 = vld [vmem:[#allocation8 + $0x1a8] sm:$0xff]
    %v858 = vld [vmem:[#allocation8 + $0x1b0] sm:$0xff]
    %v859 = vld [vmem:[#allocation8 + $0x1b8] sm:$0xff]
    %v860 = vld [vmem:[#allocation8 + $0x1c0] sm:$0xff]
    %v861 = vld [vmem:[#allocation8 + $0x1c8] sm:$0xff]
    %v862 = vld [vmem:[#allocation8 + $0x1d0] sm:$0xff]
    %v863 = vld [vmem:[#allocation8 + $0x1d8] sm:$0xff]
    %v864 = vld [vmem:[#allocation8 + $0x1e0] sm:$0xff]
    %v865 = vld [vmem:[#allocation8 + $0x1e8] sm:$0xff]
    %v866 = vld [vmem:[#allocation8 + $0x1f0] sm:$0xff]
    %v867 = vld [vmem:[#allocation8 + $0x1f8] sm:$0xff]
    %v868 = vld [vmem:[#allocation8 + $0x200] sm:$0xff]
    %v869 = vld [vmem:[#allocation8 + $0x208] sm:$0xff]
    %v870 = vld [vmem:[#allocation8 + $0x210] sm:$0xff]
    %v871 = vld [vmem:[#allocation8 + $0x218] sm:$0xff]
    %v872 = vld [vmem:[#allocation8 + $0x220] sm:$0xff]
    %v873 = vld [vmem:[#allocation8 + $0x228] sm:$0xff]
    %v874 = vld [vmem:[#allocation8 + $0x230] sm:$0xff]
    %v875 = vld [vmem:[#allocation8 + $0x238] sm:$0xff]
    %v876 = vld [vmem:[#allocation8 + $0x240] sm:$0xff]
    %v877 = vld [vmem:[#allocation8 + $0x248] sm:$0xff]
    %v878 = vld [vmem:[#allocation8 + $0x250] sm:$0xff]
    %v879 = vld [vmem:[#allocation8 + $0x258] sm:$0xff]
    %v880 = vld [vmem:[#allocation8 + $0x260] sm:$0xff]
    %v881 = vld [vmem:[#allocation8 + $0x268] sm:$0xff]
    %v882 = vld [vmem:[#allocation8 + $0x270] sm:$0xff]
    %v883 = vld [vmem:[#allocation8 + $0x278] sm:$0xff]
    %v884 = vld [vmem:[#allocation8 + $0x280] sm:$0xff]
    %v885 = vld [vmem:[#allocation8 + $0x288] sm:$0xff]
    %v886 = vld [vmem:[#allocation8 + $0x290] sm:$0xff]
    %v887 = vld [vmem:[#allocation8 + $0x298] sm:$0xff]
    %v888 = vld [vmem:[#allocation8 + $0x2a0] sm:$0xff]
    %v889 = vld [vmem:[#allocation8 + $0x2a8] sm:$0xff]
    %v890 = vld [vmem:[#allocation8 + $0x2b0] sm:$0xff]
    %v891 = vld [vmem:[#allocation8 + $0x2b8] sm:$0xff]
    %v892 = vld [vmem:[#allocation8 + $0x2c0] sm:$0xff]
    %v893 = vld [vmem:[#allocation8 + $0x2c8] sm:$0xff]
    %v894 = vld [vmem:[#allocation8 + $0x2d0] sm:$0xff]
    %v895 = vld [vmem:[#allocation8 + $0x2d8] sm:$0xff]
    %v896 = vld [vmem:[#allocation8 + $0x2e0] sm:$0xff]
    %v897 = vld [vmem:[#allocation8 + $0x2e8] sm:$0xff]
    %v898 = vld [vmem:[#allocation8 + $0x2f0] sm:$0xff]
    %v899 = vld [vmem:[#allocation8 + $0x2f8] sm:$0xff]
    %v900 = vld [vmem:[#allocation8 + $0x300] sm:$0xff]
    %v901 = vld [vmem:[#allocation8 + $0x308] sm:$0xff]
    %v902 = vld [vmem:[#allocation8 + $0x310] sm:$0xff]
    %v903 = vld [vmem:[#allocation8 + $0x318] sm:$0xff]
    %v904 = vld [vmem:[#allocation8 + $0x320] sm:$0xff]
    %v905 = vld [vmem:[#allocation8 + $0x328] sm:$0xff]
    %v906 = vld [vmem:[#allocation8 + $0x330] sm:$0xff]
    %v907 = vld [vmem:[#allocation8 + $0x338] sm:$0xff]
    %v908 = vld [vmem:[#allocation8 + $0x340] sm:$0xff]
    %v909 = vld [vmem:[#allocation8 + $0x348] sm:$0xff]
    %v910 = vld [vmem:[#allocation8 + $0x350] sm:$0xff]
    %v911 = vld [vmem:[#allocation8 + $0x358] sm:$0xff]
    %v912 = vld [vmem:[#allocation8 + $0x360] sm:$0xff]
    %v913 = vld [vmem:[#allocation8 + $0x368] sm:$0xff]
    %v914 = vld [vmem:[#allocation8 + $0x370] sm:$0xff]
    %v915 = vld [vmem:[#allocation8 + $0x378] sm:$0xff]
    %v916 = vld [vmem:[#allocation8 + $0x380] sm:$0xff]
    %v917 = vld [vmem:[#allocation8 + $0x388] sm:$0xff]
    %v918 = vld [vmem:[#allocation8 + $0x390] sm:$0xff]
    %v919 = vld [vmem:[#allocation8 + $0x398] sm:$0xff]
    %v920 = vld [vmem:[#allocation8 + $0x3a0] sm:$0xff]
    %v921 = vld [vmem:[#allocation8 + $0x3a8] sm:$0xff]
    %v922 = vld [vmem:[#allocation8 + $0x3b0] sm:$0xff]
    %v923 = vld [vmem:[#allocation8 + $0x3b8] sm:$0xff]
    %v924 = vld [vmem:[#allocation8 + $0x3c0] sm:$0xff]
    %v925 = vld [vmem:[#allocation8 + $0x3c8] sm:$0xff]
    %v926 = vld [vmem:[#allocation8 + $0x3d0] sm:$0xff]
    %v927 = vld [vmem:[#allocation8 + $0x3d8] sm:$0xff]
    %v928 = vld [vmem:[#allocation8 + $0x3e0] sm:$0xff]
    %v929 = vld [vmem:[#allocation8 + $0x3e8] sm:$0xff]
    %v930 = vld [vmem:[#allocation8 + $0x3f0] sm:$0xff]
    %v931 = vld [vmem:[#allocation8 + $0x3f8] sm:$0xff]
    %v932 = vld [vmem:[#allocation8 + $0x400] sm:$0xff]
    %v933 = vld [vmem:[#allocation8 + $0x408] sm:$0xff]
    %v934 = vld [vmem:[#allocation8 + $0x410] sm:$0xff]
    %v935 = vld [vmem:[#allocation8 + $0x418] sm:$0xff]
    %v936 = vld [vmem:[#allocation8 + $0x420] sm:$0xff]
    %v937 = vld [vmem:[#allocation8 + $0x428] sm:$0xff]
    %v938 = vld [vmem:[#allocation8 + $0x430] sm:$0xff]
    %v939 = vld [vmem:[#allocation8 + $0x438] sm:$0xff]
    %v940 = vld [vmem:[#allocation8 + $0x440] sm:$0xff]
    %v941 = vld [vmem:[#allocation8 + $0x448] sm:$0xff]
    %v942 = vld [vmem:[#allocation8 + $0x450] sm:$0xff]
    %v943 = vld [vmem:[#allocation8 + $0x458] sm:$0xff]
    %v944 = vld [vmem:[#allocation8 + $0x460] sm:$0xff]
    %v945 = vld [vmem:[#allocation8 + $0x468] sm:$0xff]
    %v946 = vld [vmem:[#allocation8 + $0x470] sm:$0xff]
    %v947 = vld [vmem:[#allocation8 + $0x478] sm:$0xff]
    %v948 = vld [vmem:[%s6] sm:$0x7]
    %v950 = vlaneseq
    %v951 = vshrl.u32 %v950, 7
    %v952 = vsub.s32 0, %v951
    %v953 = vrot.slane %v948, %v952
    %v954 = vlaneseq
    %v955 = vshrl.u32 %v954, 7
    %v956 = vsub.s32 1, %v955
    %v957 = vrot.slane %v948, %v956
    %v958 = vlaneseq
    %v959 = vshrl.u32 %v958, 7
    %v960 = vsub.s32 2, %v959
    %v961 = vrot.slane %v948, %v960
    %965 = vmatprep.subr.mxu0 %v805
    %966 = vmatpush1.msra.mxu0 %v804
    %967 = vmatprep.subr.mxu0 %v808
    %968 = vmatpush1.msra.mxu0 %v807
    %969 = vmatprep.subr.mxu0 %v811
    %970 = vmatpush1.msra.mxu0 %v810
    %971 = vmatprep.subr.mxu0 %v814
    %972 = vmatpush1.msra.mxu0 %v813
    %973 = vmatprep.subr.mxu0 %v817
    %974 = vmatpush1.msra.mxu0 %v816
    %975 = vmatprep.subr.mxu0 %v820
    %976 = vmatpush1.msra.mxu0 %v819
    %977 = vmatprep.subr.mxu0 %v823
    %978 = vmatpush1.msra.mxu0 %v822
    %979 = vmatprep.subr.mxu0 %v826
    %980 = vmatpush1.msra.mxu0 %v825
    %981 = vmatprep.subr.mxu0 %v829
    %982 = vmatpush1.msra.mxu0 %v828
    %983 = vmatprep.subr.mxu0 %v832
    %984 = vmatpush1.msra.mxu0 %v831
    %985 = vmatprep.subr.mxu0 %v835
    %986 = vmatpush1.msra.mxu0 %v834
    %987 = vmatprep.subr.mxu0 %v838
    %988 = vmatpush1.msra.mxu0 %v837
    %989 = vmatprep.subr.mxu0 %v841
    %990 = vmatpush1.msra.mxu0 %v840
    %991 = vmatprep.subr.mxu0 %v844
    %992 = vmatpush1.msra.mxu0 %v843
    %993 = vmatprep.subr.mxu0 %v847
    %994 = vmatpush1.msra.mxu0 %v846
    %995 = vmatprep.subr.mxu0 %v850
    %996 = vmatpush1.msra.mxu0 %v849
    %997 = vmatprep.subr.mxu0 %v853
    %998 = vmatpush1.msra.mxu0 %v852
    %999 = vmatprep.subr.mxu0 %v856
    %1000 = vmatpush1.msra.mxu0 %v855
    %1001 = vmatprep.subr.mxu0 %v859
    %1002 = vmatpush1.msra.mxu0 %v858
    %1003 = vmatprep.subr.mxu0 %v862
    %1004 = vmatpush1.msra.mxu0 %v861
    %1005 = vmatprep.subr.mxu0 %v865
    %1006 = vmatpush1.msra.mxu0 %v864
    %1007 = vmatprep.subr.mxu0 %v868
    %1008 = vmatpush1.msra.mxu0 %v867
    %1009 = vmatprep.subr.mxu0 %v871
    %1010 = vmatpush1.msra.mxu0 %v870
    %1011 = vmatprep.subr.mxu0 %v874
    %1012 = vmatpush1.msra.mxu0 %v873
    %1013 = vmatprep.subr.mxu0 %v877
    %1014 = vmatpush1.msra.mxu0 %v876
    %1015 = vmatprep.subr.mxu0 %v880
    %1016 = vmatpush1.msra.mxu0 %v879
    %1017 = vmatprep.subr.mxu0 %v883
    %1018 = vmatpush1.msra.mxu0 %v882
    %1019 = vmatprep.subr.mxu0 %v886
    %1020 = vmatpush1.msra.mxu0 %v885
    %1021 = vmatprep.subr.mxu0 %v889
    %1022 = vmatpush1.msra.mxu0 %v888
    %1023 = vmatprep.subr.mxu0 %v892
    %1024 = vmatpush1.msra.mxu0 %v891
    %1025 = vmatprep.subr.mxu0 %v895
    %1026 = vmatpush1.msra.mxu0 %v894
    %1027 = vmatprep.subr.mxu0 %v898
    %1028 = vmatpush1.msra.mxu0 %v897
    %1029 = vmatprep.mubr.f32.mxu0 %v802
    %1030 = vmatmul.mubr.f32.gmra.mrb[0].mxu0 %v801
    %v1031 = vpop.f32.mrb[0].mxu0
    %v1032 = vadd.f32 %v953, %v1031
    %v1033 = vpop.f32.mrb[0].mxu0
    %v1034 = vadd.f32 %v957, %v1033
    %1035 = vdwg.mxu0
    %1036 = vmatprep.subr.mxu0 %v901
    %1037 = vmatpush1.msra.mxu0 %v900
    %1038 = vmatprep.subr.mxu0 %v904
    %1039 = vmatpush1.msra.mxu0 %v903
    %1040 = vmatprep.subr.mxu0 %v907
    %1041 = vmatpush1.msra.mxu0 %v906
    %1042 = vmatprep.subr.mxu0 %v910
    %1043 = vmatpush1.msra.mxu0 %v909
    %1044 = vmatprep.subr.mxu0 %v913
    %1045 = vmatpush1.msra.mxu0 %v912
    %1046 = vmatprep.subr.mxu0 %v916
    %1047 = vmatpush1.msra.mxu0 %v915
    %1048 = vmatprep.subr.mxu0 %v919
    %1049 = vmatpush1.msra.mxu0 %v918
    %1050 = vmatprep.subr.mxu0 %v922
    %1051 = vmatpush1.msra.mxu0 %v921
    %1052 = vmatprep.subr.mxu0 %v925
    %1053 = vmatpush1.msra.mxu0 %v924
    %1054 = vmatprep.subr.mxu0 %v928
    %1055 = vmatpush1.msra.mxu0 %v927
    %1056 = vmatprep.subr.mxu0 %v931
    %1057 = vmatpush1.msra.mxu0 %v930
    %1058 = vmatprep.subr.mxu0 %v934
    %1059 = vmatpush1.msra.mxu0 %v933
    %1060 = vmatprep.subr.mxu0 %v937
    %1061 = vmatpush1.msra.mxu0 %v936
    %1062 = vmatprep.subr.mxu0 %v940
    %1063 = vmatpush1.msra.mxu0 %v939
    %1064 = vmatprep.subr.mxu0 %v943
    %1065 = vmatpush1.msra.mxu0 %v942
    %1066 = vmatprep.subr.mxu0 %v946
    %1067 = vmatpush1.msra.mxu0 %v945
    %1068 = vmatprep.subr.mxu0 0.0
    %1069 = vmatpush1.msra.mxu0 0.0
    %1070 = vmatprep.subr.mxu0 0.0
    %1071 = vmatpush1.msra.mxu0 0.0
    %1072 = vmatprep.subr.mxu0 0.0
    %1073 = vmatpush1.msra.mxu0 0.0
    %1074 = vmatprep.subr.mxu0 0.0
    %1075 = vmatpush1.msra.mxu0 0.0
    %1076 = vmatprep.subr.mxu0 0.0
    %1077 = vmatpush1.msra.mxu0 0.0
    %1078 = vmatprep.subr.mxu0 0.0
    %1079 = vmatpush1.msra.mxu0 0.0
    %1080 = vmatprep.subr.mxu0 0.0
    %1081 = vmatpush1.msra.mxu0 0.0
    %1082 = vmatprep.subr.mxu0 0.0
    %1083 = vmatpush1.msra.mxu0 0.0
    %1084 = vmatprep.subr.mxu0 0.0
    %1085 = vmatpush1.msra.mxu0 0.0
    %1086 = vmatprep.subr.mxu0 0.0
    %1087 = vmatpush1.msra.mxu0 0.0
    %1088 = vmatprep.subr.mxu0 0.0
    %1089 = vmatpush1.msra.mxu0 0.0
    %1090 = vmatprep.subr.mxu0 0.0
    %1091 = vmatpush1.msra.mxu0 0.0
    %1092 = vmatprep.subr.mxu0 0.0
    %1093 = vmatpush1.msra.mxu0 0.0
    %1094 = vmatprep.subr.mxu0 0.0
    %1095 = vmatpush1.msra.mxu0 0.0
    %1096 = vmatprep.subr.mxu0 0.0
    %1097 = vmatpush1.msra.mxu0 0.0
    %1098 = vmatprep.subr.mxu0 0.0
    %1099 = vmatpush1.msra.mxu0 0.0
    %1100 = vmatprep.mubr.f32.mxu0 0.0
    %1101 = vmatmul.mubr.f32.gmra.mrb[0].mxu0 %v803
    %v1102 = vpop.f32.mrb[0].mxu0
    %v1103 = vadd.f32 %v1032, %v1102
    %v1104 = vpop.f32.mrb[0].mxu0
    %v1105 = vadd.f32 %v1034, %v1104
    %1106 = vdwg.mxu0
    %1107 = vmatprep.subr.mxu0 0.0
    %1108 = vmatpush1.msra.mxu0 %v806
    %1109 = vmatprep.subr.mxu0 0.0
    %1110 = vmatpush1.msra.mxu0 %v809
    %1111 = vmatprep.subr.mxu0 0.0
    %1112 = vmatpush1.msra.mxu0 %v812
    %1113 = vmatprep.subr.mxu0 0.0
    %1114 = vmatpush1.msra.mxu0 %v815
    %1115 = vmatprep.subr.mxu0 0.0
    %1116 = vmatpush1.msra.mxu0 %v818
    %1117 = vmatprep.subr.mxu0 0.0
    %1118 = vmatpush1.msra.mxu0 %v821
    %1119 = vmatprep.subr.mxu0 0.0
    %1120 = vmatpush1.msra.mxu0 %v824
    %1121 = vmatprep.subr.mxu0 0.0
    %1122 = vmatpush1.msra.mxu0 %v827
    %1123 = vmatprep.subr.mxu0 0.0
    %1124 = vmatpush1.msra.mxu0 %v830
    %1125 = vmatprep.subr.mxu0 0.0
    %1126 = vmatpush1.msra.mxu0 %v833
    %1127 = vmatprep.subr.mxu0 0.0
    %1128 = vmatpush1.msra.mxu0 %v836
    %1129 = vmatprep.subr.mxu0 0.0
    %1130 = vmatpush1.msra.mxu0 %v839
    %1131 = vmatprep.subr.mxu0 0.0
    %1132 = vmatpush1.msra.mxu0 %v842
    %1133 = vmatprep.subr.mxu0 0.0
    %1134 = vmatpush1.msra.mxu0 %v845
    %1135 = vmatprep.subr.mxu0 0.0
    %1136 = vmatpush1.msra.mxu0 %v848
    %1137 = vmatprep.subr.mxu0 0.0
    %1138 = vmatpush1.msra.mxu0 %v851
    %1139 = vmatprep.subr.mxu0 0.0
    %1140 = vmatpush1.msra.mxu0 %v854
    %1141 = vmatprep.subr.mxu0 0.0
    %1142 = vmatpush1.msra.mxu0 %v857
    %1143 = vmatprep.subr.mxu0 0.0
    %1144 = vmatpush1.msra.mxu0 %v860
    %1145 = vmatprep.subr.mxu0 0.0
    %1146 = vmatpush1.msra.mxu0 %v863
    %1147 = vmatprep.subr.mxu0 0.0
    %1148 = vmatpush1.msra.mxu0 %v866
    %1149 = vmatprep.subr.mxu0 0.0
    %1150 = vmatpush1.msra.mxu0 %v869
    %1151 = vmatprep.subr.mxu0 0.0
    %1152 = vmatpush1.msra.mxu0 %v872
    %1153 = vmatprep.subr.mxu0 0.0
    %1154 = vmatpush1.msra.mxu0 %v875
    %1155 = vmatprep.subr.mxu0 0.0
    %1156 = vmatpush1.msra.mxu0 %v878
    %1157 = vmatprep.subr.mxu0 0.0
    %1158 = vmatpush1.msra.mxu0 %v881
    %1159 = vmatprep.subr.mxu0 0.0
    %1160 = vmatpush1.msra.mxu0 %v884
    %1161 = vmatprep.subr.mxu0 0.0
    %1162 = vmatpush1.msra.mxu0 %v887
    %1163 = vmatprep.subr.mxu0 0.0
    %1164 = vmatpush1.msra.mxu0 %v890
    %1165 = vmatprep.subr.mxu0 0.0
    %1166 = vmatpush1.msra.mxu0 %v893
    %1167 = vmatprep.subr.mxu0 0.0
    %1168 = vmatpush1.msra.mxu0 %v896
    %1169 = vmatprep.subr.mxu0 0.0
    %1170 = vmatpush1.msra.mxu0 %v899
    %1171 = vmatprep.mubr.f32.mxu0 %v802
    %1172 = vmatmul.mubr.f32.gmra.mrb[0].mxu0 %v801
    %v1173 = vpop.f32.mrb[0].mxu0
    %v1174 = vadd.f32 %v961, %v1173
    %v1175 = vpop.f32.mrb[0].mxu0
    %1176 = vdwg.mxu0
    %1177 = vmatprep.subr.mxu0 0.0
    %1178 = vmatpush1.msra.mxu0 %v902
    %1179 = vmatprep.subr.mxu0 0.0
    %1180 = vmatpush1.msra.mxu0 %v905
    %1181 = vmatprep.subr.mxu0 0.0
    %1182 = vmatpush1.msra.mxu0 %v908
    %1183 = vmatprep.subr.mxu0 0.0
    %1184 = vmatpush1.msra.mxu0 %v911
    %1185 = vmatprep.subr.mxu0 0.0
    %1186 = vmatpush1.msra.mxu0 %v914
    %1187 = vmatprep.subr.mxu0 0.0
    %1188 = vmatpush1.msra.mxu0 %v917
    %1189 = vmatprep.subr.mxu0 0.0
    %1190 = vmatpush1.msra.mxu0 %v920
    %1191 = vmatprep.subr.mxu0 0.0
    %1192 = vmatpush1.msra.mxu0 %v923
    %1193 = vmatprep.subr.mxu0 0.0
    %1194 = vmatpush1.msra.mxu0 %v926
    %1195 = vmatprep.subr.mxu0 0.0
    %1196 = vmatpush1.msra.mxu0 %v929
    %1197 = vmatprep.subr.mxu0 0.0
    %1198 = vmatpush1.msra.mxu0 %v932
    %1199 = vmatprep.subr.mxu0 0.0
    %1200 = vmatpush1.msra.mxu0 %v935
    %1201 = vmatprep.subr.mxu0 0.0
    %1202 = vmatpush1.msra.mxu0 %v938
    %1203 = vmatprep.subr.mxu0 0.0
    %1204 = vmatpush1.msra.mxu0 %v941
    %1205 = vmatprep.subr.mxu0 0.0
    %1206 = vmatpush1.msra.mxu0 %v944
    %1207 = vmatprep.subr.mxu0 0.0
    %1208 = vmatpush1.msra.mxu0 %v947
    %1209 = vmatprep.subr.mxu0 0.0
    %1210 = vmatpush1.msra.mxu0 0.0
    %1211 = vmatprep.subr.mxu0 0.0
    %1212 = vmatpush1.msra.mxu0 0.0
    %1213 = vmatprep.subr.mxu0 0.0
    %1214 = vmatpush1.msra.mxu0 0.0
    %1215 = vmatprep.subr.mxu0 0.0
    %1216 = vmatpush1.msra.mxu0 0.0
    %1217 = vmatprep.subr.mxu0 0.0
    %1218 = vmatpush1.msra.mxu0 0.0
    %1219 = vmatprep.subr.mxu0 0.0
    %1220 = vmatpush1.msra.mxu0 0.0
    %1221 = vmatprep.subr.mxu0 0.0
    %1222 = vmatpush1.msra.mxu0 0.0
    %1223 = vmatprep.subr.mxu0 0.0
    %1224 = vmatpush1.msra.mxu0 0.0
    %1225 = vmatprep.subr.mxu0 0.0
    %1226 = vmatpush1.msra.mxu0 0.0
    %1227 = vmatprep.subr.mxu0 0.0
    %1228 = vmatpush1.msra.mxu0 0.0
    %1229 = vmatprep.subr.mxu0 0.0
    %1230 = vmatpush1.msra.mxu0 0.0
    %1231 = vmatprep.subr.mxu0 0.0
    %1232 = vmatpush1.msra.mxu0 0.0
    %1233 = vmatprep.subr.mxu0 0.0
    %1234 = vmatpush1.msra.mxu0 0.0
    %1235 = vmatprep.subr.mxu0 0.0
    %1236 = vmatpush1.msra.mxu0 0.0
    %1237 = vmatprep.subr.mxu0 0.0
    %1238 = vmatpush1.msra.mxu0 0.0
    %1239 = vmatprep.subr.mxu0 0.0
    %1240 = vmatpush1.msra.mxu0 0.0
    %1241 = vmatprep.mubr.f32.mxu0 0.0
    %1242 = vmatmul.mubr.f32.gmra.mrb[0].mxu0 %v803
    %v1243 = vpop.f32.mrb[0].mxu0
    %v1244 = vadd.f32 %v1174, %v1243
    %v1245 = vpop.f32.mrb[0].mxu0
    %1246 = vdwg.mxu0
    %v1247 = vmax.f32 %v1103, 0.0
    %v1248 = vmax.f32 %v1105, 0.0
    %v1249 = vmax.f32 %v1244, 0.0
    %v1250 = vld [vmem:[#allocation10] sm:$0xff]
    %v1251 = vld [vmem:[#allocation10 + $0x8] sm:$0xff]
    %v1252 = vld [vmem:[#allocation10 + $0x10] sm:$0xff]
    %v1253 = vld [vmem:[#allocation10 + $0x18] sm:$0xff]
    %v1254 = vld [vmem:[#allocation10 + $0x20] sm:$0xff]
    %v1255 = vld [vmem:[#allocation10 + $0x28] sm:$0xff]
    %v1256 = vld [vmem:[#allocation10 + $0x30] sm:$0xff]
    %v1257 = vld [vmem:[#allocation10 + $0x38] sm:$0xff]
    %v1258 = vld [vmem:[#allocation10 + $0x40] sm:$0xff]
    %v1259 = vld [vmem:[#allocation10 + $0x48] sm:$0xff]
    %v1260 = vld [vmem:[#allocation10 + $0x50] sm:$0xff]
    %v1261 = vld [vmem:[#allocation10 + $0x58] sm:$0xff]
    %v1262 = vld [vmem:[#allocation10 + $0x60] sm:$0xff]
    %v1263 = vld [vmem:[#allocation10 + $0x68] sm:$0xff]
    %v1264 = vld [vmem:[#allocation10 + $0x70] sm:$0xff]
    %v1265 = vld [vmem:[#allocation10 + $0x78] sm:$0xff]
    %v1266 = vld [vmem:[#allocation10 + $0x80] sm:$0xff]
    %v1267 = vld [vmem:[#allocation10 + $0x88] sm:$0xff]
    %v1268 = vld [vmem:[#allocation10 + $0x90] sm:$0xff]
    %v1269 = vld [vmem:[#allocation10 + $0x98] sm:$0xff]
    %v1270 = vld [vmem:[#allocation10 + $0xa0] sm:$0xff]
    %v1271 = vld [vmem:[#allocation10 + $0xa8] sm:$0xff]
    %v1272 = vld [vmem:[#allocation10 + $0xb0] sm:$0xff]
    %v1273 = vld [vmem:[#allocation10 + $0xb8] sm:$0xff]
    %v1274 = vld [vmem:[#allocation10 + $0xc0] sm:$0xff]
    %v1275 = vld [vmem:[#allocation10 + $0xc8] sm:$0xff]
    %v1276 = vld [vmem:[#allocation10 + $0xd0] sm:$0xff]
    %v1277 = vld [vmem:[#allocation10 + $0xd8] sm:$0xff]
    %v1278 = vld [vmem:[#allocation10 + $0xe0] sm:$0xff]
    %v1279 = vld [vmem:[#allocation10 + $0xe8] sm:$0xff]
    %v1280 = vld [vmem:[#allocation10 + $0xf0] sm:$0xff]
    %v1281 = vld [vmem:[#allocation10 + $0xf8] sm:$0xff]
    %v1282 = vld [vmem:[#allocation10 + $0x100] sm:$0xff]
    %v1283 = vld [vmem:[#allocation10 + $0x108] sm:$0xff]
    %v1284 = vld [vmem:[#allocation10 + $0x110] sm:$0xff]
    %v1285 = vld [vmem:[#allocation10 + $0x118] sm:$0xff]
    %v1286 = vld [vmem:[#allocation10 + $0x120] sm:$0xff]
    %v1287 = vld [vmem:[#allocation10 + $0x128] sm:$0xff]
    %v1288 = vld [vmem:[#allocation10 + $0x130] sm:$0xff]
    %v1289 = vld [vmem:[#allocation10 + $0x138] sm:$0xff]
    %v1290 = vld [vmem:[#allocation10 + $0x140] sm:$0xff]
    %v1291 = vld [vmem:[#allocation10 + $0x148] sm:$0xff]
    %v1292 = vld [vmem:[#allocation10 + $0x150] sm:$0xff]
    %v1293 = vld [vmem:[#allocation10 + $0x158] sm:$0xff]
    %v1294 = vld [vmem:[#allocation10 + $0x160] sm:$0xff]
    %v1295 = vld [vmem:[#allocation10 + $0x168] sm:$0xff]
    %v1296 = vld [vmem:[#allocation10 + $0x170] sm:$0xff]
    %v1297 = vld [vmem:[#allocation10 + $0x178] sm:$0xff]
    %v1298 = vld [vmem:[%s8] sm:$0x1]
    %v1300 = vlaneseq
    %v1301 = vshrl.u32 %v1300, 7
    %v1302 = vsub.s32 0, %v1301
    %v1303 = vrot.slane %v1298, %v1302
    %1305 = vmatprep.subr.mxu0 0.0
    %1306 = vmatpush1.msra.mxu0 %v1250
    %1307 = vmatprep.subr.mxu0 0.0
    %1308 = vmatpush1.msra.mxu0 %v1251
    %1309 = vmatprep.subr.mxu0 0.0
    %1310 = vmatpush1.msra.mxu0 %v1252
    %1311 = vmatprep.subr.mxu0 0.0
    %1312 = vmatpush1.msra.mxu0 %v1253
    %1313 = vmatprep.subr.mxu0 0.0
    %1314 = vmatpush1.msra.mxu0 %v1254
    %1315 = vmatprep.subr.mxu0 0.0
    %1316 = vmatpush1.msra.mxu0 %v1255
    %1317 = vmatprep.subr.mxu0 0.0
    %1318 = vmatpush1.msra.mxu0 %v1256
    %1319 = vmatprep.subr.mxu0 0.0
    %1320 = vmatpush1.msra.mxu0 %v1257
    %1321 = vmatprep.subr.mxu0 0.0
    %1322 = vmatpush1.msra.mxu0 %v1258
    %1323 = vmatprep.subr.mxu0 0.0
    %1324 = vmatpush1.msra.mxu0 %v1259
    %1325 = vmatprep.subr.mxu0 0.0
    %1326 = vmatpush1.msra.mxu0 %v1260
    %1327 = vmatprep.subr.mxu0 0.0
    %1328 = vmatpush1.msra.mxu0 %v1261
    %1329 = vmatprep.subr.mxu0 0.0
    %1330 = vmatpush1.msra.mxu0 %v1262
    %1331 = vmatprep.subr.mxu0 0.0
    %1332 = vmatpush1.msra.mxu0 %v1263
    %1333 = vmatprep.subr.mxu0 0.0
    %1334 = vmatpush1.msra.mxu0 %v1264
    %1335 = vmatprep.subr.mxu0 0.0
    %1336 = vmatpush1.msra.mxu0 %v1265
    %1337 = vmatprep.subr.mxu0 0.0
    %1338 = vmatpush1.msra.mxu0 %v1266
    %1339 = vmatprep.subr.mxu0 0.0
    %1340 = vmatpush1.msra.mxu0 %v1267
    %1341 = vmatprep.subr.mxu0 0.0
    %1342 = vmatpush1.msra.mxu0 %v1268
    %1343 = vmatprep.subr.mxu0 0.0
    %1344 = vmatpush1.msra.mxu0 %v1269
    %1345 = vmatprep.subr.mxu0 0.0
    %1346 = vmatpush1.msra.mxu0 %v1270
    %1347 = vmatprep.subr.mxu0 0.0
    %1348 = vmatpush1.msra.mxu0 %v1271
    %1349 = vmatprep.subr.mxu0 0.0
    %1350 = vmatpush1.msra.mxu0 %v1272
    %1351 = vmatprep.subr.mxu0 0.0
    %1352 = vmatpush1.msra.mxu0 %v1273
    %1353 = vmatprep.subr.mxu0 0.0
    %1354 = vmatpush1.msra.mxu0 %v1274
    %1355 = vmatprep.subr.mxu0 0.0
    %1356 = vmatpush1.msra.mxu0 %v1275
    %1357 = vmatprep.subr.mxu0 0.0
    %1358 = vmatpush1.msra.mxu0 %v1276
    %1359 = vmatprep.subr.mxu0 0.0
    %1360 = vmatpush1.msra.mxu0 %v1277
    %1361 = vmatprep.subr.mxu0 0.0
    %1362 = vmatpush1.msra.mxu0 %v1278
    %1363 = vmatprep.subr.mxu0 0.0
    %1364 = vmatpush1.msra.mxu0 %v1279
    %1365 = vmatprep.subr.mxu0 0.0
    %1366 = vmatpush1.msra.mxu0 %v1280
    %1367 = vmatprep.subr.mxu0 0.0
    %1368 = vmatpush1.msra.mxu0 %v1281
    %1369 = vmatprep.mubr.f32.mxu0 %v1248
    %1370 = vmatmul.mubr.f32.gmra.mrb[0].mxu0 %v1247
    %v1371 = vpop.f32.mrb[0].mxu0
    %v1372 = vadd.f32 %v1303, %v1371
    %v1373 = vpop.f32.mrb[0].mxu0
    %1374 = vdwg.mxu0
    %1375 = vmatprep.subr.mxu0 0.0
    %1376 = vmatpush1.msra.mxu0 %v1282
    %1377 = vmatprep.subr.mxu0 0.0
    %1378 = vmatpush1.msra.mxu0 %v1283
    %1379 = vmatprep.subr.mxu0 0.0
    %1380 = vmatpush1.msra.mxu0 %v1284
    %1381 = vmatprep.subr.mxu0 0.0
    %1382 = vmatpush1.msra.mxu0 %v1285
    %1383 = vmatprep.subr.mxu0 0.0
    %1384 = vmatpush1.msra.mxu0 %v1286
    %1385 = vmatprep.subr.mxu0 0.0
    %1386 = vmatpush1.msra.mxu0 %v1287
    %1387 = vmatprep.subr.mxu0 0.0
    %1388 = vmatpush1.msra.mxu0 %v1288
    %1389 = vmatprep.subr.mxu0 0.0
    %1390 = vmatpush1.msra.mxu0 %v1289
    %1391 = vmatprep.subr.mxu0 0.0
    %1392 = vmatpush1.msra.mxu0 %v1290
    %1393 = vmatprep.subr.mxu0 0.0
    %1394 = vmatpush1.msra.mxu0 %v1291
    %1395 = vmatprep.subr.mxu0 0.0
    %1396 = vmatpush1.msra.mxu0 %v1292
    %1397 = vmatprep.subr.mxu0 0.0
    %1398 = vmatpush1.msra.mxu0 %v1293
    %1399 = vmatprep.subr.mxu0 0.0
    %1400 = vmatpush1.msra.mxu0 %v1294
    %1401 = vmatprep.subr.mxu0 0.0
    %1402 = vmatpush1.msra.mxu0 %v1295
    %1403 = vmatprep.subr.mxu0 0.0
    %1404 = vmatpush1.msra.mxu0 %v1296
    %1405 = vmatprep.subr.mxu0 0.0
    %1406 = vmatpush1.msra.mxu0 %v1297
    %1407 = vmatprep.subr.mxu0 0.0
    %1408 = vmatpush1.msra.mxu0 0.0
    %1409 = vmatprep.subr.mxu0 0.0
    %1410 = vmatpush1.msra.mxu0 0.0
    %1411 = vmatprep.subr.mxu0 0.0
    %1412 = vmatpush1.msra.mxu0 0.0
    %1413 = vmatprep.subr.mxu0 0.0
    %1414 = vmatpush1.msra.mxu0 0.0
    %1415 = vmatprep.subr.mxu0 0.0
    %1416 = vmatpush1.msra.mxu0 0.0
    %1417 = vmatprep.subr.mxu0 0.0
    %1418 = vmatpush1.msra.mxu0 0.0
    %1419 = vmatprep.subr.mxu0 0.0
    %1420 = vmatpush1.msra.mxu0 0.0
    %1421 = vmatprep.subr.mxu0 0.0
    %1422 = vmatpush1.msra.mxu0 0.0
    %1423 = vmatprep.subr.mxu0 0.0
    %1424 = vmatpush1.msra.mxu0 0.0
    %1425 = vmatprep.subr.mxu0 0.0
    %1426 = vmatpush1.msra.mxu0 0.0
    %1427 = vmatprep.subr.mxu0 0.0
    %1428 = vmatpush1.msra.mxu0 0.0
    %1429 = vmatprep.subr.mxu0 0.0
    %1430 = vmatpush1.msra.mxu0 0.0
    %1431 = vmatprep.subr.mxu0 0.0
    %1432 = vmatpush1.msra.mxu0 0.0
    %1433 = vmatprep.subr.mxu0 0.0
    %1434 = vmatpush1.msra.mxu0 0.0
    %1435 = vmatprep.subr.mxu0 0.0
    %1436 = vmatpush1.msra.mxu0 0.0
    %1437 = vmatprep.subr.mxu0 0.0
    %1438 = vmatpush1.msra.mxu0 0.0
    %1439 = vmatprep.mubr.f32.mxu0 0.0
    %1440 = vmatmul.mubr.f32.gmra.mrb[0].mxu0 %v1249
    %v1441 = vpop.f32.mrb[0].mxu0
    %v1442 = vadd.f32 %v1372, %v1441
    %v1443 = vpop.f32.mrb[0].mxu0
    %1444 = vdwg.mxu0
    %1445 = vst [vmem:[#allocation11] sm:$0xff] %v1442
    // Predicated region
    $region58: #{tpu_custom_call.1} parent=1 // pred_check
      _
    $region59: #{tpu_custom_call.1} parent=1 // pred_check_branch
      %1447 = sbr.rel (0) target = $region61
    $region60: #{tpu_custom_call.1} parent=1 // pred_region
      %s1449 = ssub.s32 128, 128
      %1450 = vsyncadd [#allocation4], %s1449
      %s1452 = sshll.u32 [#allocation11], 4
      %s1453 = int_to_ptr.vmem [resolvable:$true] %s1452
      %1455 = dma.vmem_to_hbm [thread:$0]  %s1453, 128, %s9, [#allocation4]
    $region61: #{tpu_custom_call.1} parent=1 // pred_fallthru
      _
    // Predicated region
    $region62: #{tpu_custom_call.1} parent=1 // pred_check
      _
    $region63: #{tpu_custom_call.1} parent=1 // pred_check_branch
      %1457 = sbr.rel (0) target = $region65
    $region64: #{tpu_custom_call.1} parent=1 // pred_region
      %1458 = dma.done [#allocation4], 128
    $region65: #{tpu_custom_call.1} parent=1 // pred_fallthru
      _
    %1459 = vsyncpa [#allocation3], 1
    %1460 = vsyncpa [#allocation6], 1
    %1461 = vsyncpa [#allocation9], 1
    %1462 = vsyncpa [#allocation4], 1

</llo_original>
